<compile_context>
chip_gen: v5e
topology: v5e:2x2
jax: 0.10.0
libtpu: 0.0.40
codegen_flags: <defaults>
</compile_context>

<pallas_src>
import functools

import jax
import jax.numpy as jnp
from jax import lax
from jax.experimental import pallas as pl
from jax.experimental.pallas import tpu as pltpu


# ----------------------------- Pallas kernels -------------------------------

def _attn_flash_kernel(att_q_ref, x_q_ref, att_kv_ref, x_kv_ref,
                       wq_ref, bq_ref, wk_ref, bk_ref, wv_ref, bv_ref,
                       gamma_ref, o_ref, m_sc, l_sc, acc_sc):
    """One (batch, q-tile, kv-tile) step of CustomAttention with online softmax."""
    ki = pl.program_id(2)

    @pl.when(ki == 0)
    def _():
        m_sc[...] = jnp.full(m_sc.shape, -jnp.inf, jnp.float32)
        l_sc[...] = jnp.zeros(l_sc.shape, jnp.float32)
        acc_sc[...] = jnp.zeros(acc_sc.shape, jnp.float32)

    att_q = att_q_ref[0].astype(jnp.bfloat16)     # (C, Tq)
    att_kv = att_kv_ref[0].astype(jnp.bfloat16)   # (C, Tk)
    x_kv = x_kv_ref[0].astype(jnp.bfloat16)       # (C, Tk)
    wq = wq_ref[...].astype(jnp.bfloat16)         # (Cq, C)
    wk = wk_ref[...].astype(jnp.bfloat16)         # (Cq, C)
    wv = wv_ref[...].astype(jnp.bfloat16)         # (C, C)

    # q produced already transposed: (Tq, Cq). Only the tiny channel dim is
    # relayouted; no HW-sized transpose anywhere in this kernel.
    q_t = lax.dot_general(att_q, wq, (((0,), (1,)), ((), ())),
                          preferred_element_type=jnp.float32) + bq_ref[...]
    # k stays (Cq, Tk): plain MXU orientation for q_t @ k.
    k = jnp.dot(wk, att_kv, preferred_element_type=jnp.float32) + bk_ref[...]
    # v produced already transposed: (Tk, C), so p @ v_t needs no transpose.
    v_t = lax.dot_general(x_kv, wv, (((0,), (1,)), ((), ())),
                          preferred_element_type=jnp.float32) + bv_ref[...]

    # NOTE: with Cq = C//8 (often 1) this matmul underutilizes the MXU; a VPU
    # broadcast-multiply would be better for Cq == 1. Kept generic here.
    s = jnp.dot(q_t.astype(jnp.bfloat16), k.astype(jnp.bfloat16),
                preferred_element_type=jnp.float32)              # (Tq, Tk)

    m_prev = m_sc[...]
    m_new = jnp.maximum(m_prev, jnp.max(s, axis=-1, keepdims=True))
    alpha = jnp.exp(m_prev - m_new)                              # (Tq, 1)
    p = jnp.exp(s - m_new)                                       # (Tq, Tk) f32
    l_sc[...] = alpha * l_sc[...] + jnp.sum(p, axis=-1, keepdims=True)
    acc_sc[...] = alpha * acc_sc[...] + jnp.dot(
        p.astype(jnp.bfloat16), v_t.astype(jnp.bfloat16),
        preferred_element_type=jnp.float32)                      # (Tq, C)
    m_sc[...] = m_new

    @pl.when(ki == pl.num_programs(2) - 1)
    def _():
        inv_l = pl.reciprocal(l_sc[...], approx=True)            # (Tq, 1), EUP
        out_t = acc_sc[...] * inv_l                              # (Tq, C)
        out = out_t.T                                            # tiny (C, Tq) transpose
        o_ref[0] = gamma_ref[0, 0] * out + x_q_ref[0]            # residual in f32


def _conv5x5_bn_relu_kernel(x_ref, w_ref, scale_ref, shift_ref, o_ref, *, H, W):
    """5x5 conv (padding=2) + folded BN (eval) + ReLU as 25 shifted matmuls."""
    hw = H * W
    x_bf = x_ref[0].astype(jnp.bfloat16)                         # (C, HW)
    row = lax.broadcasted_iota(jnp.int32, (1, hw), 1) // W
    col = lax.broadcasted_iota(jnp.int32, (1, hw), 1) % W
    acc = jnp.zeros(o_ref.shape[1:], jnp.float32)                # (Cout, HW)
    for dy in range(5):
        for dx in range(5):
            off = (dy - 2) * W + (dx - 2)
            shifted = x_bf if off == 0 else pltpu.roll(
                x_bf, shift=(-off) % hw, axis=1)                 # XLU lane rotate
            w_t = w_ref[dy * 5 + dx].astype(jnp.bfloat16)        # (Cout, C)
            tap = jnp.dot(w_t, shifted, preferred_element_type=jnp.float32)
            # Zero-padding: mask output positions whose tap falls off the image
            # (also kills the cyclic wrap of the roll). Elementwise kept in f32.
            valid = ((row >= 2 - dy) & (row < H + 2 - dy) &
                     (col >= 2 - dx) & (col < W + 2 - dx))       # (1, HW)
            acc = acc + jnp.where(valid, tap, 0.0)
    y = acc * scale_ref[...] + shift_ref[...]                    # folded conv-bias + BN
    o_ref[0] = jnp.maximum(y, 0.0)


# ------------------------------ wrappers -------------------------------------

def _pick_tile(hw):
    # Biggest of {512,256,128} that divides HW and leaves >=2 tiles (keeps
    # blocks lane-dense and exercises the online-softmax carry); otherwise use
    # the full extent (block == full dim is always legal).
    for t in (512, 256, 128):
        if hw % t == 0 and hw > t:
            return t
    return hw


def custom_attention(att, x, wq, bq, wk, bk, wv, bv, gamma, *, tq=None, tk=None):
    B, C, H, W = x.shape
    Cq = wq.shape[0]
    HW = H * W
    tq = _pick_tile(HW) if tq is None else tq
    tk = _pick_tile(HW) if tk is None else tk
    assert HW % tq == 0 and HW % tk == 0

    att_f = att.reshape(B, C, HW).astype(jnp.float32)
    x_f = x.reshape(B, C, HW).astype(jnp.float32)
    bq2 = bq.reshape(1, Cq).astype(jnp.float32)
    bk2 = bk.reshape(Cq, 1).astype(jnp.float32)
    bv2 = bv.reshape(1, C).astype(jnp.float32)
    gamma2 = gamma.reshape(1, 1).astype(jnp.float32)

    out = pl.pallas_call(
        _attn_flash_kernel,
        out_shape=jax.ShapeDtypeStruct((B, C, HW), jnp.float32),
        grid=(B, HW // tq, HW // tk),
        in_specs=[
            pl.BlockSpec((1, C, tq), lambda b, qi, ki: (b, 0, qi)),   # att, q tile
            pl.BlockSpec((1, C, tq), lambda b, qi, ki: (b, 0, qi)),   # x, residual tile
            pl.BlockSpec((1, C, tk), lambda b, qi, ki: (b, 0, ki)),   # att, kv tile
            pl.BlockSpec((1, C, tk), lambda b, qi, ki: (b, 0, ki)),   # x, kv tile
            pl.BlockSpec((Cq, C), lambda b, qi, ki: (0, 0)),          # wq
            pl.BlockSpec((1, Cq), lambda b, qi, ki: (0, 0)),          # bq
            pl.BlockSpec((Cq, C), lambda b, qi, ki: (0, 0)),          # wk
            pl.BlockSpec((Cq, 1), lambda b, qi, ki: (0, 0)),          # bk
            pl.BlockSpec((C, C), lambda b, qi, ki: (0, 0)),           # wv
            pl.BlockSpec((1, C), lambda b, qi, ki: (0, 0)),           # bv
            pl.BlockSpec(memory_space=pltpu.MemorySpace.SMEM),        # gamma scalar
        ],
        out_specs=pl.BlockSpec((1, C, tq), lambda b, qi, ki: (b, 0, qi)),
        scratch_shapes=[
            pltpu.VMEM((tq, 1), jnp.float32),   # running max
            pltpu.VMEM((tq, 1), jnp.float32),   # running sum
            pltpu.VMEM((tq, C), jnp.float32),   # output accumulator (q-major)
        ],
        compiler_params=pltpu.CompilerParams(
            dimension_semantics=("parallel", "parallel", "arbitrary")),
    )(att_f, x_f, att_f, x_f, wq, bq2, wk, bk2, wv, bv2, gamma2)
    return out.reshape(B, C, H, W)


def conv5x5_bn_relu(x, w5, scale, shift):
    B, C, H, W = x.shape
    Cout = w5.shape[0]
    HW = H * W
    x_f = x.reshape(B, C, HW).astype(jnp.float32)
    # (dy,dx)-major tap layout so the kernel indexes one (Cout, C) slab per tap.
    w_taps = jnp.transpose(w5, (2, 3, 0, 1)).reshape(25, Cout, C).astype(jnp.float32)
    scale2 = scale.reshape(Cout, 1).astype(jnp.float32)
    shift2 = shift.reshape(Cout, 1).astype(jnp.float32)

    # TODO(synk): for very large H*W add an HW (row) tile axis with a 2-row halo
    # so the (C, HW) block does not need to fit in VMEM whole (v7x: 64 MiB).
    out = pl.pallas_call(
        functools.partial(_conv5x5_bn_relu_kernel, H=H, W=W),
        out_shape=jax.ShapeDtypeStruct((B, Cout, HW), jnp.float32),
        grid=(B,),
        in_specs=[
            pl.BlockSpec((1, C, HW), lambda b: (b, 0, 0)),
            pl.BlockSpec((25, Cout, C), lambda b: (0, 0, 0)),
            pl.BlockSpec((Cout, 1), lambda b: (0, 0)),
            pl.BlockSpec((Cout, 1), lambda b: (0, 0)),
        ],
        out_specs=pl.BlockSpec((1, Cout, HW), lambda b: (b, 0, 0)),
        compiler_params=pltpu.CompilerParams(dimension_semantics=("parallel",)),
    )(x_f, w_taps, scale2, shift2)
    return out.reshape(B, Cout, H, W)


def feature_shifter_att(params, att, x):
    # TODO(synk): fuse attn1 -> conv -> attn2 into a single pallas_call (keep the
    # (C, HW) intermediates in VMEM) to drop the two intermediate HBM round-trips.
    y = custom_attention(att, x, *params["attn1"])
    y = conv5x5_bn_relu(y, params["conv_w"], params["bn_scale"], params["bn_shift"])
    y = custom_attention(att, y, *params["attn2"])
    return y


# --------------------------- parameter init ----------------------------------

def _conv_init(key, out_c, in_c, kh, kw):
    kw_key, kb_key = jax.random.split(key)
    fan_in = in_c * kh * kw
    bound = 1.0 / (fan_in ** 0.5)
    w = jax.random.uniform(kw_key, (out_c, in_c, kh, kw), jnp.float32, -bound, bound)
    b = jax.random.uniform(kb_key, (out_c,), jnp.float32, -bound, bound)
    return w, b


def init_custom_attention(key, input_nc):
    qk_nc = max(input_nc // 8, 1)
    kq, kk, kv = jax.random.split(key, 3)
    wq, bq = _conv_init(kq, qk_nc, input_nc, 1, 1)
    wk, bk = _conv_init(kk, qk_nc, input_nc, 1, 1)
    wv, bv = _conv_init(kv, input_nc, input_nc, 1, 1)
    # PyTorch initializes gamma to 0; use a nonzero deterministic value so the
    # attention branch actually contributes to the checked output.
    gamma = jnp.full((1, 1), 0.1, jnp.float32)
    return (wq.reshape(qk_nc, input_nc), bq,
            wk.reshape(qk_nc, input_nc), bk,
            wv.reshape(input_nc, input_nc), bv,
            gamma)


def init_feature_shifter(key, input_nc, output_nc=None):
    if output_nc is None:
        output_nc = input_nc
    k1, k2, k3 = jax.random.split(key, 3)
    conv_w, conv_b = _conv_init(k2, output_nc, input_nc, 5, 5)
    # TODO(synk): BatchNorm2d implemented in eval mode (folded running stats),
    # not train-mode batch statistics; defaults weight=1, bias=0, mean=0, var=1.
    bn_w = jnp.ones((output_nc,), jnp.float32)
    bn_b = jnp.zeros((output_nc,), jnp.float32)
    run_mean = jnp.zeros((output_nc,), jnp.float32)
    run_var = jnp.ones((output_nc,), jnp.float32)
    eps = 1e-5
    scale = bn_w / jnp.sqrt(run_var + eps)
    shift = (conv_b - run_mean) * scale + bn_b
    return {
        "attn1": init_custom_attention(k1, input_nc),
        "conv_w": conv_w,
        "conv_b": conv_b,
        "bn": (bn_w, bn_b, run_mean, run_var, eps),
        "bn_scale": scale,
        "bn_shift": shift,
        "attn2": init_custom_attention(k3, output_nc),
    }


# --------------------------- pure-JAX reference -------------------------------

def _ref_attention(att, x, wq, bq, wk, bk, wv, bv, gamma):
    B, C, H, W = x.shape
    HW = H * W
    a = att.reshape(B, C, HW)
    xf = x.reshape(B, C, HW)
    q = jnp.einsum("qc,bcn->bqn", wq, a) + bq[None, :, None]
    k = jnp.einsum("qc,bcn->bqn", wk, a) + bk[None, :, None]
    v = jnp.einsum("oc,bcn->bon", wv, xf) + bv[None, :, None]
    energy = jnp.einsum("bci,bcj->bij", q, k)
    attn = jax.nn.softmax(energy, axis=-1)
    out = jnp.einsum("bcj,bij->bci", v, attn)
    return (gamma[0, 0] * out + xf).reshape(B, C, H, W)


def _ref_forward(params, att, x):
    y = _ref_attention(att, x, *params["attn1"])
    y = lax.conv_general_dilated(
        y, params["conv_w"], (1, 1), ((2, 2), (2, 2)),
        dimension_numbers=("NCHW", "OIHW", "NCHW"))
    y = y + params["conv_b"].reshape(1, -1, 1, 1)
    bn_w, bn_b, mean, var, eps = params["bn"]
    y = (y - mean.reshape(1, -1, 1, 1)) / jnp.sqrt(var.reshape(1, -1, 1, 1) + eps)
    y = y * bn_w.reshape(1, -1, 1, 1) + bn_b.reshape(1, -1, 1, 1)
    y = jnp.maximum(y, 0.0)
    y = _ref_attention(att, y, *params["attn2"])
    return y


if __name__ == "__main__":
    B, C, H, W = 2, 4, 16, 16
    key = jax.random.PRNGKey(0)
    kp, ka, kx = jax.random.split(key, 3)
    params = init_feature_shifter(kp, C)
    att = jax.random.normal(ka, (B, C, H, W), jnp.float32)
    x = jax.random.normal(kx, (B, C, H, W), jnp.float32)

    out = feature_shifter_att(params, att, x)
    out = jax.block_until_ready(out)

    ref = _ref_forward(params, att, x)
    assert out.shape == (B, C, H, W)
    assert bool(jnp.all(jnp.isfinite(out)))
    # Tolerance accounts for bf16 MXU operands (accumulation stays f32).
    assert bool(jnp.allclose(out, ref, rtol=3e-2, atol=3e-2)), \
        float(jnp.max(jnp.abs(out - ref)))
    print("KERNEL_OK")
</pallas_src>

<mosaic_0001>
module attributes {stable_mosaic.version = 11 : i64} {
  func.func @_attn_flash_kernel(%arg0: i32, %arg1: i32, %arg2: i32, %arg3: memref<1x4x128xf32, #tpu.memory_space<vmem>>, %arg4: memref<1x4x128xf32, #tpu.memory_space<vmem>>, %arg5: memref<1x4x128xf32, #tpu.memory_space<vmem>>, %arg6: memref<1x4x128xf32, #tpu.memory_space<vmem>>, %arg7: memref<1x4xf32, #tpu.memory_space<vmem>>, %arg8: memref<1x1xf32, #tpu.memory_space<vmem>>, %arg9: memref<1x4xf32, #tpu.memory_space<vmem>>, %arg10: memref<1x1xf32, #tpu.memory_space<vmem>>, %arg11: memref<4x4xf32, #tpu.memory_space<vmem>>, %arg12: memref<1x4xf32, #tpu.memory_space<vmem>>, %arg13: memref<1x1xf32, #tpu.memory_space<smem>>, %arg14: memref<1x4x128xf32, #tpu.memory_space<vmem>>, %arg15: memref<128x1xf32, #tpu.memory_space<vmem>>, %arg16: memref<128x1xf32, #tpu.memory_space<vmem>>, %arg17: memref<128x4xf32, #tpu.memory_space<vmem>>) attributes {dimension_semantics = [#tpu.dimension_semantics<parallel>, #tpu.dimension_semantics<parallel>, #tpu.dimension_semantics<arbitrary>], iteration_bounds = array<i64: 2, 2, 2>, scalar_prefetch = 0 : i64, scratch_operands = 3 : i64, tpu.core_type = #tpu.core_type<tc>, window_params = [{transform_indices = @transform_0, window_bounds = array<i64: 1, 4, 128>}, {transform_indices = @transform_1, window_bounds = array<i64: 1, 4, 128>}, {transform_indices = @transform_2, window_bounds = array<i64: 1, 4, 128>}, {transform_indices = @transform_3, window_bounds = array<i64: 1, 4, 128>}, {pipeline_mode = #tpu.pipeline_mode<synchronous>, transform_indices = @transform_4, window_bounds = array<i64: 1, 4>}, {pipeline_mode = #tpu.pipeline_mode<synchronous>, transform_indices = @transform_5, window_bounds = array<i64: 1, 1>}, {pipeline_mode = #tpu.pipeline_mode<synchronous>, transform_indices = @transform_6, window_bounds = array<i64: 1, 4>}, {pipeline_mode = #tpu.pipeline_mode<synchronous>, transform_indices = @transform_7, window_bounds = array<i64: 1, 1>}, {pipeline_mode = #tpu.pipeline_mode<synchronous>, transform_indices = @transform_8, window_bounds = array<i64: 4, 4>}, {pipeline_mode = #tpu.pipeline_mode<synchronous>, transform_indices = @transform_9, window_bounds = array<i64: 1, 4>}, {transform_indices = @transform_10, window_bounds = array<i64: 1, 1>}, {transform_indices = @transform_11, window_bounds = array<i64: 1, 4, 128>}]} {
    %c0_i32 = arith.constant 0 : i32
    %0 = arith.cmpi eq, %arg2, %c0_i32 : i32
    %1 = arith.extui %0 : i1 to i32
    %c0_i32_0 = arith.constant 0 : i32
    %2 = arith.cmpi ne, %1, %c0_i32_0 : i32
    scf.if %2 {
      %cst_40 = arith.constant 0xFF800000 : f32
      %60 = vector.broadcast %cst_40 : f32 to vector<128x1xf32>
      %c0_41 = arith.constant 0 : index
      %c0_42 = arith.constant 0 : index
      %61 = vector.load %arg15[%c0_41, %c0_42] : memref<128x1xf32, #tpu.memory_space<vmem>>, vector<128x1xf32>
      tpu.vector_store %arg15[%c0_41, %c0_42], %60 {strides = array<i32>} : memref<128x1xf32, #tpu.memory_space<vmem>>, vector<128x1xf32>,
      %cst_43 = arith.constant 0.000000e+00 : f32
      %62 = vector.broadcast %cst_43 : f32 to vector<128x1xf32>
      %c0_44 = arith.constant 0 : index
      %c0_45 = arith.constant 0 : index
      %63 = vector.load %arg16[%c0_44, %c0_45] : memref<128x1xf32, #tpu.memory_space<vmem>>, vector<128x1xf32>
      tpu.vector_store %arg16[%c0_44, %c0_45], %62 {strides = array<i32>} : memref<128x1xf32, #tpu.memory_space<vmem>>, vector<128x1xf32>,
      %cst_46 = arith.constant 0.000000e+00 : f32
      %64 = vector.broadcast %cst_46 : f32 to vector<128x4xf32>
      %c0_47 = arith.constant 0 : index
      %c0_48 = arith.constant 0 : index
      %65 = vector.load %arg17[%c0_47, %c0_48] : memref<128x4xf32, #tpu.memory_space<vmem>>, vector<128x4xf32>
      tpu.vector_store %arg17[%c0_47, %c0_48], %64 {strides = array<i32>} : memref<128x4xf32, #tpu.memory_space<vmem>>, vector<128x4xf32>,
    } else {
    }
    %c0 = arith.constant 0 : index
    %c0_1 = arith.constant 0 : index
    %c0_2 = arith.constant 0 : index
    %3 = vector.load %arg3[%c0, %c0_1, %c0_2] : memref<1x4x128xf32, #tpu.memory_space<vmem>>, vector<1x4x128xf32>
    %4 = vector.shape_cast %3 : vector<1x4x128xf32> to vector<4x128xf32>
    %5 = arith.truncf %4 : vector<4x128xf32> to vector<4x128xbf16>
    %c0_3 = arith.constant 0 : index
    %c0_4 = arith.constant 0 : index
    %c0_5 = arith.constant 0 : index
    %6 = vector.load %arg5[%c0_3, %c0_4, %c0_5] : memref<1x4x128xf32, #tpu.memory_space<vmem>>, vector<1x4x128xf32>
    %7 = vector.shape_cast %6 : vector<1x4x128xf32> to vector<4x128xf32>
    %8 = arith.truncf %7 : vector<4x128xf32> to vector<4x128xbf16>
    %c0_6 = arith.constant 0 : index
    %c0_7 = arith.constant 0 : index
    %c0_8 = arith.constant 0 : index
    %9 = vector.load %arg6[%c0_6, %c0_7, %c0_8] : memref<1x4x128xf32, #tpu.memory_space<vmem>>, vector<1x4x128xf32>
    %10 = vector.shape_cast %9 : vector<1x4x128xf32> to vector<4x128xf32>
    %11 = arith.truncf %10 : vector<4x128xf32> to vector<4x128xbf16>
    %c0_9 = arith.constant 0 : index
    %c0_10 = arith.constant 0 : index
    %12 = vector.load %arg7[%c0_9, %c0_10] : memref<1x4xf32, #tpu.memory_space<vmem>>, vector<1x4xf32>
    %13 = arith.truncf %12 : vector<1x4xf32> to vector<1x4xbf16>
    %c0_11 = arith.constant 0 : index
    %c0_12 = arith.constant 0 : index
    %14 = vector.load %arg9[%c0_11, %c0_12] : memref<1x4xf32, #tpu.memory_space<vmem>>, vector<1x4xf32>
    %15 = arith.truncf %14 : vector<1x4xf32> to vector<1x4xbf16>
    %c0_13 = arith.constant 0 : index
    %c0_14 = arith.constant 0 : index
    %16 = vector.load %arg11[%c0_13, %c0_14] : memref<4x4xf32, #tpu.memory_space<vmem>>, vector<4x4xf32>
    %17 = arith.truncf %16 : vector<4x4xf32> to vector<4x4xbf16>
    %cst = arith.constant dense<0.000000e+00> : vector<128x1xf32>
    %18 = tpu.matmul %5, %13, %cst {dimension_numbers = #tpu.dot_dimension_numbers<[0], [1], [1], [0], [0, 1, 1, 0], [], []>} : vector<4x128xbf16>, vector<1x4xbf16>, vector<128x1xf32> -> vector<128x1xf32>
    %c0_15 = arith.constant 0 : index
    %c0_16 = arith.constant 0 : index
    %19 = vector.load %arg8[%c0_15, %c0_16] : memref<1x1xf32, #tpu.memory_space<vmem>>, vector<1x1xf32>
    %20 = vector.broadcast %19 : vector<1x1xf32> to vector<128x1xf32>
    %21 = arith.addf %18, %20 : vector<128x1xf32>
    %cst_17 = arith.constant dense<0.000000e+00> : vector<1x128xf32>
    %22 = tpu.matmul %15, %8, %cst_17 {dimension_numbers = #tpu.dot_dimension_numbers<[1], [0], [0], [1], [0, 0, 1, 1], [], []>} : vector<1x4xbf16>, vector<4x128xbf16>, vector<1x128xf32> -> vector<1x128xf32>
    %c0_18 = arith.constant 0 : index
    %c0_19 = arith.constant 0 : index
    %23 = vector.load %arg10[%c0_18, %c0_19] : memref<1x1xf32, #tpu.memory_space<vmem>>, vector<1x1xf32>
    %24 = vector.broadcast %23 : vector<1x1xf32> to vector<1x128xf32>
    %25 = arith.addf %22, %24 : vector<1x128xf32>
    %cst_20 = arith.constant dense<0.000000e+00> : vector<128x4xf32>
    %26 = tpu.matmul %11, %17, %cst_20 {dimension_numbers = #tpu.dot_dimension_numbers<[0], [1], [1], [0], [0, 1, 1, 0], [], []>} : vector<4x128xbf16>, vector<4x4xbf16>, vector<128x4xf32> -> vector<128x4xf32>
    %c0_21 = arith.constant 0 : index
    %c0_22 = arith.constant 0 : index
    %27 = vector.load %arg12[%c0_21, %c0_22] : memref<1x4xf32, #tpu.memory_space<vmem>>, vector<1x4xf32>
    %28 = vector.broadcast %27 : vector<1x4xf32> to vector<128x4xf32>
    %29 = arith.addf %26, %28 : vector<128x4xf32>
    %30 = arith.truncf %21 : vector<128x1xf32> to vector<128x1xbf16>
    %31 = arith.truncf %25 : vector<1x128xf32> to vector<1x128xbf16>
    %cst_23 = arith.constant dense<0.000000e+00> : vector<128x128xf32>
    %32 = tpu.matmul %30, %31, %cst_23 {dimension_numbers = #tpu.dot_dimension_numbers<[1], [0], [0], [1], [0, 0, 1, 1], [], []>} : vector<128x1xbf16>, vector<1x128xbf16>, vector<128x128xf32> -> vector<128x128xf32>
    %c0_24 = arith.constant 0 : index
    %c0_25 = arith.constant 0 : index
    %33 = vector.load %arg15[%c0_24, %c0_25] : memref<128x1xf32, #tpu.memory_space<vmem>>, vector<128x1xf32>
    %cst_26 = arith.constant dense<0xFF800000> : vector<128xf32>
    %34 = vector.multi_reduction <maximumf>, %32, %cst_26 [1] : vector<128x128xf32> to vector<128xf32>
    %35 = vector.shape_cast %34 : vector<128xf32> to vector<128x1xf32>
    %36 = arith.maximumf %33, %35 : vector<128x1xf32>
    %37 = arith.subf %33, %36 : vector<128x1xf32>
    %38 = math.exp %37 : vector<128x1xf32>
    %39 = vector.broadcast %36 : vector<128x1xf32> to vector<128x128xf32>
    %40 = arith.subf %32, %39 : vector<128x128xf32>
    %41 = math.exp %40 : vector<128x128xf32>
    %c0_27 = arith.constant 0 : index
    %c0_28 = arith.constant 0 : index
    %42 = vector.load %arg16[%c0_27, %c0_28] : memref<128x1xf32, #tpu.memory_space<vmem>>, vector<128x1xf32>
    %43 = arith.mulf %38, %42 : vector<128x1xf32>
    %cst_29 = arith.constant dense<0.000000e+00> : vector<128xf32>
    %44 = vector.multi_reduction <add>, %41, %cst_29 [1] : vector<128x128xf32> to vector<128xf32>
    %45 = vector.shape_cast %44 : vector<128xf32> to vector<128x1xf32>
    %46 = arith.addf %43, %45 : vector<128x1xf32>
    %c0_30 = arith.constant 0 : index
    %c0_31 = arith.constant 0 : index
    %47 = vector.load %arg16[%c0_30, %c0_31] : memref<128x1xf32, #tpu.memory_space<vmem>>, vector<128x1xf32>
    tpu.vector_store %arg16[%c0_30, %c0_31], %46 {strides = array<i32>} : memref<128x1xf32, #tpu.memory_space<vmem>>, vector<128x1xf32>,
    %c0_32 = arith.constant 0 : index
    %c0_33 = arith.constant 0 : index
    %48 = vector.load %arg17[%c0_32, %c0_33] : memref<128x4xf32, #tpu.memory_space<vmem>>, vector<128x4xf32>
    %49 = vector.broadcast %38 : vector<128x1xf32> to vector<128x4xf32>
    %50 = arith.mulf %49, %48 : vector<128x4xf32>
    %51 = arith.truncf %41 : vector<128x128xf32> to vector<128x128xbf16>
    %52 = arith.truncf %29 : vector<128x4xf32> to vector<128x4xbf16>
    %cst_34 = arith.constant dense<0.000000e+00> : vector<128x4xf32>
    %53 = tpu.matmul %51, %52, %cst_34 {dimension_numbers = #tpu.dot_dimension_numbers<[1], [0], [0], [1], [0, 0, 1, 1], [], []>} : vector<128x128xbf16>, vector<128x4xbf16>, vector<128x4xf32> -> vector<128x4xf32>
    %54 = arith.addf %50, %53 : vector<128x4xf32>
    %c0_35 = arith.constant 0 : index
    %c0_36 = arith.constant 0 : index
    %55 = vector.load %arg17[%c0_35, %c0_36] : memref<128x4xf32, #tpu.memory_space<vmem>>, vector<128x4xf32>
    tpu.vector_store %arg17[%c0_35, %c0_36], %54 {strides = array<i32>} : memref<128x4xf32, #tpu.memory_space<vmem>>, vector<128x4xf32>,
    %c0_37 = arith.constant 0 : index
    %c0_38 = arith.constant 0 : index
    %56 = vector.load %arg15[%c0_37, %c0_38] : memref<128x1xf32, #tpu.memory_space<vmem>>, vector<128x1xf32>
    tpu.vector_store %arg15[%c0_37, %c0_38], %36 {strides = array<i32>} : memref<128x1xf32, #tpu.memory_space<vmem>>, vector<128x1xf32>,
    %c1_i32 = arith.constant 1 : i32
    %57 = arith.cmpi eq, %arg2, %c1_i32 : i32
    %58 = arith.extui %57 : i1 to i32
    %c0_i32_39 = arith.constant 0 : i32
    %59 = arith.cmpi ne, %58, %c0_i32_39 : i32
    scf.if %59 {
      %c0_40 = arith.constant 0 : index
      %c0_41 = arith.constant 0 : index
      %60 = vector.load %arg16[%c0_40, %c0_41] : memref<128x1xf32, #tpu.memory_space<vmem>>, vector<128x1xf32>
      %61 = tpu.reciprocal %60 {approx = true} : vector<128x1xf32> -> vector<128x1xf32>
      %c0_42 = arith.constant 0 : index
      %c0_43 = arith.constant 0 : index
      %62 = vector.load %arg17[%c0_42, %c0_43] : memref<128x4xf32, #tpu.memory_space<vmem>>, vector<128x4xf32>
      %63 = vector.broadcast %61 : vector<128x1xf32> to vector<128x4xf32>
      %64 = arith.mulf %62, %63 : vector<128x4xf32>
      %65 = tpu.transpose %64, [1, 0] : vector<128x4xf32> -> vector<4x128xf32>
      %c0_44 = arith.constant 0 : index
      %c0_45 = arith.constant 0 : index
      %66 = memref.load %arg13[%c0_44, %c0_45] : memref<1x1xf32, #tpu.memory_space<smem>>
      %67 = vector.broadcast %66 : f32 to vector<4x128xf32>
      %68 = arith.mulf %67, %65 : vector<4x128xf32>
      %c0_46 = arith.constant 0 : index
      %c0_47 = arith.constant 0 : index
      %c0_48 = arith.constant 0 : index
      %69 = vector.load %arg4[%c0_46, %c0_47, %c0_48] : memref<1x4x128xf32, #tpu.memory_space<vmem>>, vector<1x4x128xf32>
      %70 = vector.shape_cast %69 : vector<1x4x128xf32> to vector<4x128xf32>
      %71 = arith.addf %68, %70 : vector<4x128xf32>
      %c0_49 = arith.constant 0 : index
      %c0_50 = arith.constant 0 : index
      %c0_51 = arith.constant 0 : index
      %72 = vector.load %arg14[%c0_49, %c0_50, %c0_51] : memref<1x4x128xf32, #tpu.memory_space<vmem>>, vector<1x4x128xf32>
      %73 = vector.shape_cast %72 : vector<1x4x128xf32> to vector<4x128xf32>
      %74 = vector.shape_cast %71 : vector<4x128xf32> to vector<1x4x128xf32>
      tpu.vector_store %arg14[%c0_49, %c0_50, %c0_51], %74 {strides = array<i32>} : memref<1x4x128xf32, #tpu.memory_space<vmem>>, vector<1x4x128xf32>,
    } else {
    }
    return
  }
  func.func @transform_0(%arg0: i32, %arg1: i32, %arg2: i32) -> (i32, i32, i32) {
    %c0_i32 = arith.constant 0 : i32
    %c0_i32_0 = arith.constant 0 : i32
    return %arg0, %c0_i32, %arg1 : i32, i32, i32
  }
  func.func @transform_1(%arg0: i32, %arg1: i32, %arg2: i32) -> (i32, i32, i32) {
    %c0_i32 = arith.constant 0 : i32
    %c0_i32_0 = arith.constant 0 : i32
    return %arg0, %c0_i32, %arg1 : i32, i32, i32
  }
  func.func @transform_2(%arg0: i32, %arg1: i32, %arg2: i32) -> (i32, i32, i32) {
    %c0_i32 = arith.constant 0 : i32
    %c0_i32_0 = arith.constant 0 : i32
    return %arg0, %c0_i32, %arg2 : i32, i32, i32
  }
  func.func @transform_3(%arg0: i32, %arg1: i32, %arg2: i32) -> (i32, i32, i32) {
    %c0_i32 = arith.constant 0 : i32
    %c0_i32_0 = arith.constant 0 : i32
    return %arg0, %c0_i32, %arg2 : i32, i32, i32
  }
  func.func @transform_4(%arg0: i32, %arg1: i32, %arg2: i32) -> (i32, i32) {
    %c0_i32 = arith.constant 0 : i32
    %c0_i32_0 = arith.constant 0 : i32
    %c0_i32_1 = arith.constant 0 : i32
    return %c0_i32, %c0_i32_0 : i32, i32
  }
  func.func @transform_5(%arg0: i32, %arg1: i32, %arg2: i32) -> (i32, i32) {
    %c0_i32 = arith.constant 0 : i32
    %c0_i32_0 = arith.constant 0 : i32
    %c0_i32_1 = arith.constant 0 : i32
    return %c0_i32, %c0_i32_0 : i32, i32
  }
  func.func @transform_6(%arg0: i32, %arg1: i32, %arg2: i32) -> (i32, i32) {
    %c0_i32 = arith.constant 0 : i32
    %c0_i32_0 = arith.constant 0 : i32
    %c0_i32_1 = arith.constant 0 : i32
    return %c0_i32, %c0_i32_0 : i32, i32
  }
  func.func @transform_7(%arg0: i32, %arg1: i32, %arg2: i32) -> (i32, i32) {
    %c0_i32 = arith.constant 0 : i32
    %c0_i32_0 = arith.constant 0 : i32
    %c0_i32_1 = arith.constant 0 : i32
    return %c0_i32, %c0_i32_0 : i32, i32
  }
  func.func @transform_8(%arg0: i32, %arg1: i32, %arg2: i32) -> (i32, i32) {
    %c0_i32 = arith.constant 0 : i32
    %c0_i32_0 = arith.constant 0 : i32
    %c0_i32_1 = arith.constant 0 : i32
    return %c0_i32, %c0_i32_0 : i32, i32
  }
  func.func @transform_9(%arg0: i32, %arg1: i32, %arg2: i32) -> (i32, i32) {
    %c0_i32 = arith.constant 0 : i32
    %c0_i32_0 = arith.constant 0 : i32
    %c0_i32_1 = arith.constant 0 : i32
    return %c0_i32, %c0_i32_0 : i32, i32
  }
  func.func @transform_10(%arg0: i32, %arg1: i32, %arg2: i32) -> (i32, i32) {
    %c0_i32 = arith.constant 0 : i32
    %c0_i32_0 = arith.constant 0 : i32
    %c0_i32_1 = arith.constant 0 : i32
    return %c0_i32, %c0_i32_0 : i32, i32
  }
  func.func @transform_11(%arg0: i32, %arg1: i32, %arg2: i32) -> (i32, i32, i32) {
    %c0_i32 = arith.constant 0 : i32
    %c0_i32_0 = arith.constant 0 : i32
    return %arg0, %c0_i32, %arg1 : i32, i32, i32
  }
}

</mosaic_0001>

<llo_original>
// kernel: tpu_custom_call.1
$region0: #{tpu_custom_call.1}
  #allocation0 [shape = 'u32[]', space=smem, size = 0x4, offset = 0x4, fixed_abs, tag = 'smem constant byte address 0x4 - core index']
  #allocation1 [shape = 'u32[72,128]{1,0:T(1,128)}', space=vmem, size = 0x9000, scoped, tag = 'internal scratch']
  #allocation2 [shape = 'f32[128,1]{1,0:T(8,128)}', space=vmem, size = 0x10000, scoped, tag = 'scratch operand']
  #allocation3 [shape = 'f32[128,1]{1,0:T(8,128)}', space=vmem, size = 0x10000, scoped, tag = 'scratch operand']
  #allocation4 [shape = 'f32[128,4]{1,0:T(8,128)}', space=vmem, size = 0x10000, scoped, tag = 'scratch operand']
  #allocation5 [shape = 'f32[1,1]{1,0:T(1,128)S(1)}', space=vmem, size = 0x200, scoped, tag = 'scoped memory for tpu_custom_call.1']
  #allocation6 [shape = 'f32[1,1]{1,0:T(1,128)S(1)}', space=vmem, size = 0x200, scoped, tag = 'scoped memory for tpu_custom_call.1']
  #allocation7 [shape = 'f32[1,1]{1,0:T(1,128)S(6)}', space=smem, size = 0x200, scoped, tag = 'scoped memory for tpu_custom_call.1']
  %s0 = inlined_call_operand.hbm [shape: f32[2,4,256], index: 0, kind: input, shape index: {}]
  %s1 = inlined_call_operand.hbm [shape: f32[2,4,256], index: 1, kind: input, shape index: {}]
  %s2 = inlined_call_operand.hbm [shape: f32[2,4,256], index: 2, kind: input, shape index: {}]
  %s3 = inlined_call_operand.hbm [shape: f32[2,4,256], index: 3, kind: input, shape index: {}]
  %s4 = inlined_call_operand.vmem [shape: f32[1,4], index: 4, kind: input, shape index: {}]
  %s5 = inlined_call_operand.<no memory space> [shape: f32[1,1], index: 5, kind: input, shape index: {}]
  %s6 = inlined_call_operand.vmem [shape: f32[1,4], index: 6, kind: input, shape index: {}]
  %s7 = inlined_call_operand.<no memory space> [shape: f32[1,1], index: 7, kind: input, shape index: {}]
  %s8 = inlined_call_operand.vmem [shape: f32[4,4], index: 8, kind: input, shape index: {}]
  %s9 = inlined_call_operand.vmem [shape: f32[1,4], index: 9, kind: input, shape index: {}]
  %s10 = inlined_call_operand.<no memory space> [shape: f32[1,1], index: 10, kind: input, shape index: {}]
  %s11 = inlined_call_operand.hbm [shape: f32[2,4,256], index: 11, kind: output, shape index: {}]
  %s12 = sld [smem:[#allocation0]]
  $region101: #{tpu_custom_call.1} parent=0
    _
  %s14 = ssub.s32 1, %s12
  %s15 = scalar_select 0, %s14, %s12
  %v16 = vstv %s5
  %17 = vst [vmem:[#allocation5] sm:$0x1] %v16
  %v18 = vstv %s7
  %19 = vst [vmem:[#allocation6] sm:$0x1] %v18
  %20 = sst [smem:[#allocation7]] %s10
  $region1: #{tpu_custom_call.1} parent=0
    #allocation8 [shape = 'u8[4096]{0}', space=vmem, size = 0x1000, scoped, tag = 'input window, operand 0']
    #allocation9 [shape = 's32[2]{0}', space=sflag, size = 0x8, scoped, tag = 'scoped memory for tpu_custom_call.1']
    #allocation10 [shape = 's32[2]{0}', space=sflag, size = 0x8, scoped, tag = 'scoped memory for tpu_custom_call.1']
    #allocation11 [shape = 'u8[4096]{0}', space=vmem, size = 0x1000, scoped, tag = 'input window, operand 1']
    #allocation12 [shape = 's32[2]{0}', space=sflag, size = 0x8, scoped, tag = 'scoped memory for tpu_custom_call.1']
    #allocation13 [shape = 'u8[4096]{0}', space=vmem, size = 0x1000, scoped, tag = 'input window, operand 2']
    #allocation14 [shape = 'u8[4096]{0}', space=vmem, size = 0x1000, scoped, tag = 'input window, operand 3']
    #allocation15 [shape = 's32[2]{0}', space=sflag, size = 0x8, scoped, tag = 'scoped memory for tpu_custom_call.1']
    #allocation16 [shape = 'u8[4096]{0}', space=vmem, size = 0x1000, scoped, tag = 'output window, operand 0']
    %21 = vsyncpa [#allocation9], 0
    %s22 = scalar_lea.sflag [#allocation9], 1
    %23 = vsyncpa %s22, 0
    %24 = vsyncpa [#allocation12], 0
    %s25 = scalar_lea.sflag [#allocation12], 1
    %26 = vsyncpa %s25, 0
    %27 = vsyncpa [#allocation15], 0
    %s28 = scalar_lea.sflag [#allocation15], 1
    %29 = vsyncpa %s28, 0
    %30 = vsyncpa [#allocation10], 0
    %s31 = scalar_lea.sflag [#allocation10], 1
    %32 = vsyncpa %s31, 0
    loop: start=0, step=1, limit=10
    $region2: #{tpu_custom_call.1} parent=1 // loop_pre_header
      _
    $region3: #{tpu_custom_call.1} parent=1 // loop_header
      %s34 = sphi 0, %s38
      %p35 = scmp.ge.s32.totalorder %s34, 10
      %s41 = sphi 0, %s60
      %s42 = sphi 0, %s56
      %s43 = sphi 0, %s52
      %s44 = sphi 0, %s41
      %s45 = sphi 0, %s42
      %s46 = sphi 0, %s43
      %s47 = sphi 0, %s44
      %s48 = sphi 0, %s45
      %s49 = sphi 0, %s46
      %s65 = sphi 0, %s67
      %s68 = sphi 0, %s65
      %s69 = sphi 0, %s68
      %s85 = sphi 0, %s69
      %s93 = sphi 0, %s95
      %s96 = sphi 0, %s93
      %s97 = sphi 0, %s96
      %s113 = sphi 0, %s97
      %s121 = sphi 0, %s123
      %s124 = sphi 0, %s121
      %s125 = sphi 0, %s124
      %s141 = sphi 0, %s125
      %s149 = sphi 0, %s151
      %s152 = sphi 0, %s149
      %s153 = sphi 0, %s152
      %s169 = sphi 0, %s153
      %s173 = sphi 0, %s173
      %s175 = sphi 0, %s173
      %s176 = sphi 0, %s175
      %s190 = sphi 0, %s176
      %s194 = sphi 0, %s194
      %s196 = sphi 0, %s194
      %s197 = sphi 0, %s196
      %s211 = sphi 0, %s197
      %s215 = sphi 0, %s215
      %s217 = sphi 0, %s215
      %s218 = sphi 0, %s217
      %s232 = sphi 0, %s218
      %s236 = sphi 0, %s236
      %s238 = sphi 0, %s236
      %s239 = sphi 0, %s238
      %s253 = sphi 0, %s239
      %s257 = sphi 0, %s257
      %s259 = sphi 0, %s257
      %s260 = sphi 0, %s259
      %s274 = sphi 0, %s260
      %s278 = sphi 0, %s278
      %s280 = sphi 0, %s278
      %s281 = sphi 0, %s280
      %s295 = sphi 0, %s281
      %s299 = sphi 0, %s299
      %s301 = sphi 0, %s299
      %s302 = sphi 0, %s301
      %s316 = sphi 0, %s302
      %s324 = sphi 0, %s326
      %s327 = sphi 0, %s324
      %s328 = sphi 0, %s327
      %s344 = sphi 0, %s328
    $region4: #{tpu_custom_call.1} parent=1 // loop_header_branch
      %37 = sbr.rel (%p35) target = $region8
    $region5: #{tpu_custom_call.1} parent=1 // loop_body
      %s39 = ssub.s32 %s34, 1
      %s40 = ssub.s32 %s34, 2
      %s50 = sadd.s32 1, %s43
      %p51 = scmp.ge.s32.totalorder %s50, 2
      %s52 = scalar_select %p51, 0, %s50
      %s53 = sadd.s32 1, %s42
      %s54 = scalar_select %p51, %s53, %s42
      %p55 = scmp.ge.s32.totalorder %s54, 2
      %s56 = scalar_select %p55, 0, %s54
      %s57 = sadd.s32 1, %s41
      %s58 = scalar_select %p55, %s57, %s41
      %p59 = scmp.ge.s32.totalorder %s58, 2
      %s60 = scalar_select %p59, 0, %s58
      %s61 = ssub.s32 %s41, %s60
      %s62 = ssub.s32 %s42, %s56
      %s63 = sor.u32 %s61, %s62
      %p64 = scmp.eq.s32.totalorder %s63, 0
      %s66 = sadd.s32 %s65, 1
      %s67 = scalar_select %p64, %s65, %s66
      %p70 = pneg %p64
      %p71 = scmp.eq.s32.totalorder %s34, 7
      %p72 = por %p70, %p71
      %p73 = scmp.ne.s32.totalorder %s65, %s68
      %p74 = scmp.eq.s32.totalorder %s34, 0
      %p75 = por %p73, %p74
      %p76 = scmp.ne.s32.totalorder %s65, %s68
      %p77 = scmp.eq.s32.totalorder %s39, 7
      %p78 = por %p76, %p77
      %p79 = scmp.ne.s32.totalorder %s68, %s69
      %p80 = scmp.eq.s32.totalorder %s39, 0
      %p81 = por %p79, %p80
      %p82 = scmp.ne.s32.totalorder %s68, %s69
      %p83 = scmp.eq.s32.totalorder %s40, 7
      %p84 = por %p82, %p83
      %p86 = scmp.ne.s32.totalorder %s69, %s85
      %p87 = scmp.eq.s32.totalorder %s40, 0
      %p88 = por %p86, %p87
      %s89 = ssub.s32 %s41, %s60
      %s90 = ssub.s32 %s42, %s56
      %s91 = sor.u32 %s89, %s90
      %p92 = scmp.eq.s32.totalorder %s91, 0
      %s94 = sadd.s32 %s93, 1
      %s95 = scalar_select %p92, %s93, %s94
      %p98 = pneg %p92
      %p99 = scmp.eq.s32.totalorder %s34, 7
      %p100 = por %p98, %p99
      %p101 = scmp.ne.s32.totalorder %s93, %s96
      %p102 = scmp.eq.s32.totalorder %s34, 0
      %p103 = por %p101, %p102
      %p104 = scmp.ne.s32.totalorder %s93, %s96
      %p105 = scmp.eq.s32.totalorder %s39, 7
      %p106 = por %p104, %p105
      %p107 = scmp.ne.s32.totalorder %s96, %s97
      %p108 = scmp.eq.s32.totalorder %s39, 0
      %p109 = por %p107, %p108
      %p110 = scmp.ne.s32.totalorder %s96, %s97
      %p111 = scmp.eq.s32.totalorder %s40, 7
      %p112 = por %p110, %p111
      %p114 = scmp.ne.s32.totalorder %s97, %s113
      %p115 = scmp.eq.s32.totalorder %s40, 0
      %p116 = por %p114, %p115
      %s117 = ssub.s32 %s41, %s60
      %s118 = ssub.s32 %s43, %s52
      %s119 = sor.u32 %s117, %s118
      %p120 = scmp.eq.s32.totalorder %s119, 0
      %s122 = sadd.s32 %s121, 1
      %s123 = scalar_select %p120, %s121, %s122
      %p126 = pneg %p120
      %p127 = scmp.eq.s32.totalorder %s34, 7
      %p128 = por %p126, %p127
      %p129 = scmp.ne.s32.totalorder %s121, %s124
      %p130 = scmp.eq.s32.totalorder %s34, 0
      %p131 = por %p129, %p130
      %p132 = scmp.ne.s32.totalorder %s121, %s124
      %p133 = scmp.eq.s32.totalorder %s39, 7
      %p134 = por %p132, %p133
      %p135 = scmp.ne.s32.totalorder %s124, %s125
      %p136 = scmp.eq.s32.totalorder %s39, 0
      %p137 = por %p135, %p136
      %p138 = scmp.ne.s32.totalorder %s124, %s125
      %p139 = scmp.eq.s32.totalorder %s40, 7
      %p140 = por %p138, %p139
      %p142 = scmp.ne.s32.totalorder %s125, %s141
      %p143 = scmp.eq.s32.totalorder %s40, 0
      %p144 = por %p142, %p143
      %s145 = ssub.s32 %s41, %s60
      %s146 = ssub.s32 %s43, %s52
      %s147 = sor.u32 %s145, %s146
      %p148 = scmp.eq.s32.totalorder %s147, 0
      %s150 = sadd.s32 %s149, 1
      %s151 = scalar_select %p148, %s149, %s150
      %p154 = pneg %p148
      %p155 = scmp.eq.s32.totalorder %s34, 7
      %p156 = por %p154, %p155
      %p157 = scmp.ne.s32.totalorder %s149, %s152
      %p158 = scmp.eq.s32.totalorder %s34, 0
      %p159 = por %p157, %p158
      %p160 = scmp.ne.s32.totalorder %s149, %s152
      %p161 = scmp.eq.s32.totalorder %s39, 7
      %p162 = por %p160, %p161
      %p163 = scmp.ne.s32.totalorder %s152, %s153
      %p164 = scmp.eq.s32.totalorder %s39, 0
      %p165 = por %p163, %p164
      %p166 = scmp.ne.s32.totalorder %s152, %s153
      %p167 = scmp.eq.s32.totalorder %s40, 7
      %p168 = por %p166, %p167
      %p170 = scmp.ne.s32.totalorder %s153, %s169
      %p171 = scmp.eq.s32.totalorder %s40, 0
      %p172 = por %p170, %p171
      %s174 = sadd.s32 %s173, 1
      %p177 = scmp.eq.s32.totalorder %s34, 7
      %p178 = scmp.ne.s32.totalorder %s173, %s175
      %p179 = scmp.eq.s32.totalorder %s34, 0
      %p180 = por %p178, %p179
      %p181 = scmp.ne.s32.totalorder %s173, %s175
      %p182 = scmp.eq.s32.totalorder %s39, 7
      %p183 = por %p181, %p182
      %p184 = scmp.ne.s32.totalorder %s175, %s176
      %p185 = scmp.eq.s32.totalorder %s39, 0
      %p186 = por %p184, %p185
      %p187 = scmp.ne.s32.totalorder %s175, %s176
      %p188 = scmp.eq.s32.totalorder %s40, 7
      %p189 = por %p187, %p188
      %p191 = scmp.ne.s32.totalorder %s176, %s190
      %p192 = scmp.eq.s32.totalorder %s40, 0
      %p193 = por %p191, %p192
      %s195 = sadd.s32 %s194, 1
      %p198 = scmp.eq.s32.totalorder %s34, 7
      %p199 = scmp.ne.s32.totalorder %s194, %s196
      %p200 = scmp.eq.s32.totalorder %s34, 0
      %p201 = por %p199, %p200
      %p202 = scmp.ne.s32.totalorder %s194, %s196
      %p203 = scmp.eq.s32.totalorder %s39, 7
      %p204 = por %p202, %p203
      %p205 = scmp.ne.s32.totalorder %s196, %s197
      %p206 = scmp.eq.s32.totalorder %s39, 0
      %p207 = por %p205, %p206
      %p208 = scmp.ne.s32.totalorder %s196, %s197
      %p209 = scmp.eq.s32.totalorder %s40, 7
      %p210 = por %p208, %p209
      %p212 = scmp.ne.s32.totalorder %s197, %s211
      %p213 = scmp.eq.s32.totalorder %s40, 0
      %p214 = por %p212, %p213
      %s216 = sadd.s32 %s215, 1
      %p219 = scmp.eq.s32.totalorder %s34, 7
      %p220 = scmp.ne.s32.totalorder %s215, %s217
      %p221 = scmp.eq.s32.totalorder %s34, 0
      %p222 = por %p220, %p221
      %p223 = scmp.ne.s32.totalorder %s215, %s217
      %p224 = scmp.eq.s32.totalorder %s39, 7
      %p225 = por %p223, %p224
      %p226 = scmp.ne.s32.totalorder %s217, %s218
      %p227 = scmp.eq.s32.totalorder %s39, 0
      %p228 = por %p226, %p227
      %p229 = scmp.ne.s32.totalorder %s217, %s218
      %p230 = scmp.eq.s32.totalorder %s40, 7
      %p231 = por %p229, %p230
      %p233 = scmp.ne.s32.totalorder %s218, %s232
      %p234 = scmp.eq.s32.totalorder %s40, 0
      %p235 = por %p233, %p234
      %s237 = sadd.s32 %s236, 1
      %p240 = scmp.eq.s32.totalorder %s34, 7
      %p241 = scmp.ne.s32.totalorder %s236, %s238
      %p242 = scmp.eq.s32.totalorder %s34, 0
      %p243 = por %p241, %p242
      %p244 = scmp.ne.s32.totalorder %s236, %s238
      %p245 = scmp.eq.s32.totalorder %s39, 7
      %p246 = por %p244, %p245
      %p247 = scmp.ne.s32.totalorder %s238, %s239
      %p248 = scmp.eq.s32.totalorder %s39, 0
      %p249 = por %p247, %p248
      %p250 = scmp.ne.s32.totalorder %s238, %s239
      %p251 = scmp.eq.s32.totalorder %s40, 7
      %p252 = por %p250, %p251
      %p254 = scmp.ne.s32.totalorder %s239, %s253
      %p255 = scmp.eq.s32.totalorder %s40, 0
      %p256 = por %p254, %p255
      %s258 = sadd.s32 %s257, 1
      %p261 = scmp.eq.s32.totalorder %s34, 7
      %p262 = scmp.ne.s32.totalorder %s257, %s259
      %p263 = scmp.eq.s32.totalorder %s34, 0
      %p264 = por %p262, %p263
      %p265 = scmp.ne.s32.totalorder %s257, %s259
      %p266 = scmp.eq.s32.totalorder %s39, 7
      %p267 = por %p265, %p266
      %p268 = scmp.ne.s32.totalorder %s259, %s260
      %p269 = scmp.eq.s32.totalorder %s39, 0
      %p270 = por %p268, %p269
      %p271 = scmp.ne.s32.totalorder %s259, %s260
      %p272 = scmp.eq.s32.totalorder %s40, 7
      %p273 = por %p271, %p272
      %p275 = scmp.ne.s32.totalorder %s260, %s274
      %p276 = scmp.eq.s32.totalorder %s40, 0
      %p277 = por %p275, %p276
      %s279 = sadd.s32 %s278, 1
      %p282 = scmp.eq.s32.totalorder %s34, 7
      %p283 = scmp.ne.s32.totalorder %s278, %s280
      %p284 = scmp.eq.s32.totalorder %s34, 0
      %p285 = por %p283, %p284
      %p286 = scmp.ne.s32.totalorder %s278, %s280
      %p287 = scmp.eq.s32.totalorder %s39, 7
      %p288 = por %p286, %p287
      %p289 = scmp.ne.s32.totalorder %s280, %s281
      %p290 = scmp.eq.s32.totalorder %s39, 0
      %p291 = por %p289, %p290
      %p292 = scmp.ne.s32.totalorder %s280, %s281
      %p293 = scmp.eq.s32.totalorder %s40, 7
      %p294 = por %p292, %p293
      %p296 = scmp.ne.s32.totalorder %s281, %s295
      %p297 = scmp.eq.s32.totalorder %s40, 0
      %p298 = por %p296, %p297
      %s300 = sadd.s32 %s299, 1
      %p303 = scmp.eq.s32.totalorder %s34, 7
      %p304 = scmp.ne.s32.totalorder %s299, %s301
      %p305 = scmp.eq.s32.totalorder %s34, 0
      %p306 = por %p304, %p305
      %p307 = scmp.ne.s32.totalorder %s299, %s301
      %p308 = scmp.eq.s32.totalorder %s39, 7
      %p309 = por %p307, %p308
      %p310 = scmp.ne.s32.totalorder %s301, %s302
      %p311 = scmp.eq.s32.totalorder %s39, 0
      %p312 = por %p310, %p311
      %p313 = scmp.ne.s32.totalorder %s301, %s302
      %p314 = scmp.eq.s32.totalorder %s40, 7
      %p315 = por %p313, %p314
      %p317 = scmp.ne.s32.totalorder %s302, %s316
      %p318 = scmp.eq.s32.totalorder %s40, 0
      %p319 = por %p317, %p318
      %s320 = ssub.s32 %s41, %s60
      %s321 = ssub.s32 %s42, %s56
      %s322 = sor.u32 %s320, %s321
      %p323 = scmp.eq.s32.totalorder %s322, 0
      %s325 = sadd.s32 %s324, 1
      %s326 = scalar_select %p323, %s324, %s325
      %p329 = pneg %p323
      %p330 = scmp.eq.s32.totalorder %s34, 7
      %p331 = por %p329, %p330
      %p332 = scmp.ne.s32.totalorder %s324, %s327
      %p333 = scmp.eq.s32.totalorder %s34, 0
      %p334 = por %p332, %p333
      %p335 = scmp.ne.s32.totalorder %s324, %s327
      %p336 = scmp.eq.s32.totalorder %s39, 7
      %p337 = por %p335, %p336
      %p338 = scmp.ne.s32.totalorder %s327, %s328
      %p339 = scmp.eq.s32.totalorder %s39, 0
      %p340 = por %p338, %p339
      %p341 = scmp.ne.s32.totalorder %s327, %s328
      %p342 = scmp.eq.s32.totalorder %s40, 7
      %p343 = por %p341, %p342
      %p345 = scmp.ne.s32.totalorder %s328, %s344
      %p346 = scmp.eq.s32.totalorder %s40, 0
      %p347 = por %p345, %p346
      %p348 = scmp.le.s32.totalorder 1, %s34
      %p349 = scmp.lt.s32.totalorder %s34, 9
      %p350 = pnand %p348, %p349
      %p351 = pneg %p350
      // Predicated region
      $region9: #{tpu_custom_call.1} parent=5 // pred_check
        _
      $region10: #{tpu_custom_call.1} parent=5 // pred_check_branch
        %353 = sbr.rel (%p350) target = $region12
      $region11: #{tpu_custom_call.1} parent=5 // pred_region
        %s354 = ssub.s32 %s34, 1
        // Predicated region
        $region13: #{tpu_custom_call.1} parent=11 // pred_check
          %p355 = pneg %p186
        $region14: #{tpu_custom_call.1} parent=11 // pred_check_branch
          %357 = sbr.rel (%p355) target = $region16
        $region15: #{tpu_custom_call.1} parent=11 // pred_region
          _
        $region16: #{tpu_custom_call.1} parent=11 // pred_fallthru
          _
        // Predicated region
        $region17: #{tpu_custom_call.1} parent=11 // pred_check
          %p358 = pneg %p207
        $region18: #{tpu_custom_call.1} parent=11 // pred_check_branch
          %360 = sbr.rel (%p358) target = $region20
        $region19: #{tpu_custom_call.1} parent=11 // pred_region
          _
        $region20: #{tpu_custom_call.1} parent=11 // pred_fallthru
          _
        // Predicated region
        $region21: #{tpu_custom_call.1} parent=11 // pred_check
          %p361 = pneg %p228
        $region22: #{tpu_custom_call.1} parent=11 // pred_check_branch
          %363 = sbr.rel (%p361) target = $region24
        $region23: #{tpu_custom_call.1} parent=11 // pred_region
          _
        $region24: #{tpu_custom_call.1} parent=11 // pred_fallthru
          _
        // Predicated region
        $region25: #{tpu_custom_call.1} parent=11 // pred_check
          %p364 = pneg %p249
        $region26: #{tpu_custom_call.1} parent=11 // pred_check_branch
          %366 = sbr.rel (%p364) target = $region28
        $region27: #{tpu_custom_call.1} parent=11 // pred_region
          _
        $region28: #{tpu_custom_call.1} parent=11 // pred_fallthru
          _
        // Predicated region
        $region29: #{tpu_custom_call.1} parent=11 // pred_check
          %p367 = pneg %p270
        $region30: #{tpu_custom_call.1} parent=11 // pred_check_branch
          %369 = sbr.rel (%p367) target = $region32
        $region31: #{tpu_custom_call.1} parent=11 // pred_region
          _
        $region32: #{tpu_custom_call.1} parent=11 // pred_fallthru
          _
        // Predicated region
        $region33: #{tpu_custom_call.1} parent=11 // pred_check
          %p370 = pneg %p291
        $region34: #{tpu_custom_call.1} parent=11 // pred_check_branch
          %372 = sbr.rel (%p370) target = $region36
        $region35: #{tpu_custom_call.1} parent=11 // pred_region
          _
        $region36: #{tpu_custom_call.1} parent=11 // pred_fallthru
          _
        // Predicated region
        $region37: #{tpu_custom_call.1} parent=11 // pred_check
          %p373 = pneg %p312
        $region38: #{tpu_custom_call.1} parent=11 // pred_check_branch
          %375 = sbr.rel (%p373) target = $region40
        $region39: #{tpu_custom_call.1} parent=11 // pred_region
          _
        $region40: #{tpu_custom_call.1} parent=11 // pred_fallthru
          _
      $region12: #{tpu_custom_call.1} parent=5 // pred_fallthru
        _
      %p376 = scmp.lt.s32.totalorder %s34, 8
      // Predicated region
      $region41: #{tpu_custom_call.1} parent=5 // pred_check
        %p377 = pneg %p376
      $region42: #{tpu_custom_call.1} parent=5 // pred_check_branch
        %379 = sbr.rel (%p377) target = $region44
      $region43: #{tpu_custom_call.1} parent=5 // pred_region
        // Predicated region
        $region45: #{tpu_custom_call.1} parent=43 // pred_check
          %p380 = pneg %p75
        $region46: #{tpu_custom_call.1} parent=43 // pred_check_branch
          %382 = sbr.rel (%p380) target = $region48
        $region47: #{tpu_custom_call.1} parent=43 // pred_region
          %s383 = sand.u32 %s65, 1
          %s384 = scalar_lea.sflag [#allocation9], %s383
          %s385 = sand.u32 %s65, 1
          %s386 = smul.addr %s385, 4
          %s387 = scalar_lea.vmem [#allocation8], %s386
          %389 = vsyncadd %s384, 0
          %s390 = smul.addr %s41, 2
          %s391 = sadd.s32 %s42, %s390
          %s392 = smul.addr %s391, 4
          %s393 = scalar_lea.hbm %s0, %s392
          %s395 = sshll.u32 %s393, 4
          %s396 = int_to_ptr.hbm [resolvable:$true] %s395
          %s397 = sshll.u32 %s387, 4
          %s398 = int_to_ptr.vmem [resolvable:$true] %s397
          %400 = dma.hbm_to_vmem [thread:$0]  %s396, 64, %s398, %s384
        $region48: #{tpu_custom_call.1} parent=43 // pred_fallthru
          _
        // Predicated region
        $region49: #{tpu_custom_call.1} parent=43 // pred_check
          %p401 = pneg %p103
        $region50: #{tpu_custom_call.1} parent=43 // pred_check_branch
          %403 = sbr.rel (%p401) target = $region52
        $region51: #{tpu_custom_call.1} parent=43 // pred_region
          %s404 = sand.u32 %s34, 1
          %s405 = scalar_lea.sflag [#allocation12], %s404
          %s406 = sand.u32 %s93, 1
          %s407 = smul.addr %s406, 4
          %s408 = scalar_lea.vmem [#allocation11], %s407
          %410 = vsyncadd %s405, 0
          %s411 = smul.addr %s41, 2
          %s412 = sadd.s32 %s42, %s411
          %s413 = smul.addr %s412, 4
          %s414 = scalar_lea.hbm %s1, %s413
          %s416 = sshll.u32 %s414, 4
          %s417 = int_to_ptr.hbm [resolvable:$true] %s416
          %s418 = sshll.u32 %s408, 4
          %s419 = int_to_ptr.vmem [resolvable:$true] %s418
          %421 = dma.hbm_to_vmem [thread:$0]  %s417, 64, %s419, %s405
        $region52: #{tpu_custom_call.1} parent=43 // pred_fallthru
          _
        // Predicated region
        $region53: #{tpu_custom_call.1} parent=43 // pred_check
          %p422 = pneg %p131
        $region54: #{tpu_custom_call.1} parent=43 // pred_check_branch
          %424 = sbr.rel (%p422) target = $region56
        $region55: #{tpu_custom_call.1} parent=43 // pred_region
          %s425 = sand.u32 %s34, 1
          %s426 = scalar_lea.sflag [#allocation12], %s425
          %s427 = sand.u32 %s121, 1
          %s428 = smul.addr %s427, 4
          %s429 = scalar_lea.vmem [#allocation13], %s428
          %431 = vsyncadd %s426, 0
          %s432 = smul.addr %s41, 2
          %s433 = sadd.s32 %s43, %s432
          %s434 = smul.addr %s433, 4
          %s435 = scalar_lea.hbm %s2, %s434
          %s437 = sshll.u32 %s435, 4
          %s438 = int_to_ptr.hbm [resolvable:$true] %s437
          %s439 = sshll.u32 %s429, 4
          %s440 = int_to_ptr.vmem [resolvable:$true] %s439
          %442 = dma.hbm_to_vmem [thread:$0]  %s438, 64, %s440, %s426
        $region56: #{tpu_custom_call.1} parent=43 // pred_fallthru
          _
        // Predicated region
        $region57: #{tpu_custom_call.1} parent=43 // pred_check
          %p443 = pneg %p159
        $region58: #{tpu_custom_call.1} parent=43 // pred_check_branch
          %445 = sbr.rel (%p443) target = $region60
        $region59: #{tpu_custom_call.1} parent=43 // pred_region
          %s446 = sand.u32 %s149, 1
          %s447 = scalar_lea.sflag [#allocation15], %s446
          %s448 = sand.u32 %s149, 1
          %s449 = smul.addr %s448, 4
          %s450 = scalar_lea.vmem [#allocation14], %s449
          %452 = vsyncadd %s447, 0
          %s453 = smul.addr %s41, 2
          %s454 = sadd.s32 %s43, %s453
          %s455 = smul.addr %s454, 4
          %s456 = scalar_lea.hbm %s3, %s455
          %s458 = sshll.u32 %s456, 4
          %s459 = int_to_ptr.hbm [resolvable:$true] %s458
          %s460 = sshll.u32 %s450, 4
          %s461 = int_to_ptr.vmem [resolvable:$true] %s460
          %463 = dma.hbm_to_vmem [thread:$0]  %s459, 64, %s461, %s447
        $region60: #{tpu_custom_call.1} parent=43 // pred_fallthru
          _
      $region44: #{tpu_custom_call.1} parent=5 // pred_fallthru
        _
      %p464 = scmp.le.s32.totalorder 1, %s34
      %p465 = scmp.lt.s32.totalorder %s34, 9
      %p466 = pnand %p464, %p465
      %p467 = pneg %p466
      // Predicated region
      $region61: #{tpu_custom_call.1} parent=5 // pred_check
        _
      $region62: #{tpu_custom_call.1} parent=5 // pred_check_branch
        %469 = sbr.rel (%p466) target = $region64
      $region63: #{tpu_custom_call.1} parent=5 // pred_region
        %s470 = ssub.s32 %s34, 1
        %s471 = sand.u32 %s68, 1
        %s472 = scalar_lea.sflag [#allocation9], %s471
        %s473 = sand.u32 %s68, 1
        %s474 = smul.addr %s473, 4
        %s475 = scalar_lea.vmem [#allocation8], %s474
        // Predicated region
        $region65: #{tpu_custom_call.1} parent=63 // pred_check
          %p476 = pneg %p81
        $region66: #{tpu_custom_call.1} parent=63 // pred_check_branch
          %478 = sbr.rel (%p476) target = $region68
        $region67: #{tpu_custom_call.1} parent=63 // pred_region
          %480 = dma.done %s472, 64
        $region68: #{tpu_custom_call.1} parent=63 // pred_fallthru
          _
        %s481 = sand.u32 %s39, 1
        %s482 = scalar_lea.sflag [#allocation12], %s481
        %s483 = sand.u32 %s96, 1
        %s484 = smul.addr %s483, 4
        %s485 = scalar_lea.vmem [#allocation11], %s484
        // Predicated region
        $region69: #{tpu_custom_call.1} parent=63 // pred_check
          %p486 = pneg %p109
        $region70: #{tpu_custom_call.1} parent=63 // pred_check_branch
          %488 = sbr.rel (%p486) target = $region72
        $region71: #{tpu_custom_call.1} parent=63 // pred_region
          %490 = dma.done %s482, 64
        $region72: #{tpu_custom_call.1} parent=63 // pred_fallthru
          _
        %s491 = sand.u32 %s39, 1
        %s492 = scalar_lea.sflag [#allocation12], %s491
        %s493 = sand.u32 %s124, 1
        %s494 = smul.addr %s493, 4
        %s495 = scalar_lea.vmem [#allocation13], %s494
        // Predicated region
        $region73: #{tpu_custom_call.1} parent=63 // pred_check
          %p496 = pneg %p137
        $region74: #{tpu_custom_call.1} parent=63 // pred_check_branch
          %498 = sbr.rel (%p496) target = $region76
        $region75: #{tpu_custom_call.1} parent=63 // pred_region
          %500 = dma.done %s492, 64
        $region76: #{tpu_custom_call.1} parent=63 // pred_fallthru
          _
        %s501 = sand.u32 %s152, 1
        %s502 = scalar_lea.sflag [#allocation15], %s501
        %s503 = sand.u32 %s152, 1
        %s504 = smul.addr %s503, 4
        %s505 = scalar_lea.vmem [#allocation14], %s504
        // Predicated region
        $region77: #{tpu_custom_call.1} parent=63 // pred_check
          %p506 = pneg %p165
        $region78: #{tpu_custom_call.1} parent=63 // pred_check_branch
          %508 = sbr.rel (%p506) target = $region80
        $region79: #{tpu_custom_call.1} parent=63 // pred_region
          %510 = dma.done %s502, 64
        $region80: #{tpu_custom_call.1} parent=63 // pred_fallthru
          _
        %s511 = sand.u32 %s68, 1
        %s512 = scalar_lea.sflag [#allocation9], %s511
        %s513 = sand.u32 %s68, 1
        %s514 = smul.addr %s513, 4
        %s515 = scalar_lea.vmem [#allocation8], %s514
        %p516 = pneg %p81
        %p517 = pneg %p78
        %s518 = sand.u32 %s39, 1
        %s519 = scalar_lea.sflag [#allocation12], %s518
        %s520 = sand.u32 %s96, 1
        %s521 = smul.addr %s520, 4
        %s522 = scalar_lea.vmem [#allocation11], %s521
        %p523 = pneg %p109
        %p524 = pneg %p106
        %s525 = sand.u32 %s39, 1
        %s526 = scalar_lea.sflag [#allocation12], %s525
        %s527 = sand.u32 %s124, 1
        %s528 = smul.addr %s527, 4
        %s529 = scalar_lea.vmem [#allocation13], %s528
        %p530 = pneg %p137
        %p531 = pneg %p134
        %s532 = sand.u32 %s152, 1
        %s533 = scalar_lea.sflag [#allocation15], %s532
        %s534 = sand.u32 %s152, 1
        %s535 = smul.addr %s534, 4
        %s536 = scalar_lea.vmem [#allocation14], %s535
        %p537 = pneg %p165
        %p538 = pneg %p162
        %p539 = pneg %p186
        %p540 = pneg %p183
        %p541 = pneg %p207
        %p542 = pneg %p204
        %p543 = pneg %p228
        %p544 = pneg %p225
        %p545 = pneg %p249
        %p546 = pneg %p246
        %p547 = pneg %p270
        %p548 = pneg %p267
        %p549 = pneg %p291
        %p550 = pneg %p288
        %p551 = pneg %p312
        %p552 = pneg %p309
        %p553 = pneg %p340
        %p554 = pneg %p337
        %s555 = sand.u32 %s327, 1
        %s556 = scalar_lea.sflag [#allocation10], %s555
        %s557 = sand.u32 %s327, 1
        %s558 = smul.addr %s557, 4
        %s559 = scalar_lea.vmem [#allocation16], %s558
        %p561 = scmp.eq.s32.totalorder %s46, 0
        // Predicated region
        $region81: #{tpu_custom_call.1} parent=63 // pred_check
          %p562 = pneg %p561
        $region82: #{tpu_custom_call.1} parent=63 // pred_check_branch
          %564 = sbr.rel (%p562) target = $region84
        $region83: #{tpu_custom_call.1} parent=63 // pred_region
          %vm565 = vcmask 7168
          %566 = vst.msk [vmem:[#allocation2] sm:$0xff] %vm565, -inf
          %567 = vst.msk [vmem:[#allocation2 + $0x8] sm:$0xff] %vm565, -inf
          %568 = vst.msk [vmem:[#allocation2 + $0x10] sm:$0xff] %vm565, -inf
          %569 = vst.msk [vmem:[#allocation2 + $0x18] sm:$0xff] %vm565, -inf
          %570 = vst.msk [vmem:[#allocation2 + $0x20] sm:$0xff] %vm565, -inf
          %571 = vst.msk [vmem:[#allocation2 + $0x28] sm:$0xff] %vm565, -inf
          %572 = vst.msk [vmem:[#allocation2 + $0x30] sm:$0xff] %vm565, -inf
          %573 = vst.msk [vmem:[#allocation2 + $0x38] sm:$0xff] %vm565, -inf
          %574 = vst.msk [vmem:[#allocation2 + $0x40] sm:$0xff] %vm565, -inf
          %575 = vst.msk [vmem:[#allocation2 + $0x48] sm:$0xff] %vm565, -inf
          %576 = vst.msk [vmem:[#allocation2 + $0x50] sm:$0xff] %vm565, -inf
          %577 = vst.msk [vmem:[#allocation2 + $0x58] sm:$0xff] %vm565, -inf
          %578 = vst.msk [vmem:[#allocation2 + $0x60] sm:$0xff] %vm565, -inf
          %579 = vst.msk [vmem:[#allocation2 + $0x68] sm:$0xff] %vm565, -inf
          %580 = vst.msk [vmem:[#allocation2 + $0x70] sm:$0xff] %vm565, -inf
          %581 = vst.msk [vmem:[#allocation2 + $0x78] sm:$0xff] %vm565, -inf
          %582 = vst.msk [vmem:[#allocation3] sm:$0xff] %vm565, 0.0
          %583 = vst.msk [vmem:[#allocation3 + $0x8] sm:$0xff] %vm565, 0.0
          %584 = vst.msk [vmem:[#allocation3 + $0x10] sm:$0xff] %vm565, 0.0
          %585 = vst.msk [vmem:[#allocation3 + $0x18] sm:$0xff] %vm565, 0.0
          %586 = vst.msk [vmem:[#allocation3 + $0x20] sm:$0xff] %vm565, 0.0
          %587 = vst.msk [vmem:[#allocation3 + $0x28] sm:$0xff] %vm565, 0.0
          %588 = vst.msk [vmem:[#allocation3 + $0x30] sm:$0xff] %vm565, 0.0
          %589 = vst.msk [vmem:[#allocation3 + $0x38] sm:$0xff] %vm565, 0.0
          %590 = vst.msk [vmem:[#allocation3 + $0x40] sm:$0xff] %vm565, 0.0
          %591 = vst.msk [vmem:[#allocation3 + $0x48] sm:$0xff] %vm565, 0.0
          %592 = vst.msk [vmem:[#allocation3 + $0x50] sm:$0xff] %vm565, 0.0
          %593 = vst.msk [vmem:[#allocation3 + $0x58] sm:$0xff] %vm565, 0.0
          %594 = vst.msk [vmem:[#allocation3 + $0x60] sm:$0xff] %vm565, 0.0
          %595 = vst.msk [vmem:[#allocation3 + $0x68] sm:$0xff] %vm565, 0.0
          %596 = vst.msk [vmem:[#allocation3 + $0x70] sm:$0xff] %vm565, 0.0
          %597 = vst.msk [vmem:[#allocation3 + $0x78] sm:$0xff] %vm565, 0.0
          %vm598 = vcmask 31744
          %599 = vst.msk [vmem:[#allocation4] sm:$0xff] %vm598, 0.0
          %600 = vst.msk [vmem:[#allocation4 + $0x8] sm:$0xff] %vm598, 0.0
          %601 = vst.msk [vmem:[#allocation4 + $0x10] sm:$0xff] %vm598, 0.0
          %602 = vst.msk [vmem:[#allocation4 + $0x18] sm:$0xff] %vm598, 0.0
          %603 = vst.msk [vmem:[#allocation4 + $0x20] sm:$0xff] %vm598, 0.0
          %604 = vst.msk [vmem:[#allocation4 + $0x28] sm:$0xff] %vm598, 0.0
          %605 = vst.msk [vmem:[#allocation4 + $0x30] sm:$0xff] %vm598, 0.0
          %606 = vst.msk [vmem:[#allocation4 + $0x38] sm:$0xff] %vm598, 0.0
          %607 = vst.msk [vmem:[#allocation4 + $0x40] sm:$0xff] %vm598, 0.0
          %608 = vst.msk [vmem:[#allocation4 + $0x48] sm:$0xff] %vm598, 0.0
          %609 = vst.msk [vmem:[#allocation4 + $0x50] sm:$0xff] %vm598, 0.0
          %610 = vst.msk [vmem:[#allocation4 + $0x58] sm:$0xff] %vm598, 0.0
          %611 = vst.msk [vmem:[#allocation4 + $0x60] sm:$0xff] %vm598, 0.0
          %612 = vst.msk [vmem:[#allocation4 + $0x68] sm:$0xff] %vm598, 0.0
          %613 = vst.msk [vmem:[#allocation4 + $0x70] sm:$0xff] %vm598, 0.0
          %614 = vst.msk [vmem:[#allocation4 + $0x78] sm:$0xff] %vm598, 0.0
        $region84: #{tpu_custom_call.1} parent=63 // pred_fallthru
          _
        %v615 = vld [vmem:[%s475] sm:$0xf]
        %v616 = vpack.c.bf16 %v615, %v615
        %v617 = vld [vmem:[%s495] sm:$0xf]
        %v618 = vpack.c.bf16 %v617, %v617
        %v619 = vld [vmem:[%s505] sm:$0xf]
        %v620 = vpack.c.bf16 %v619, %v619
        %v621 = vld [vmem:[%s4] sm:$0x1]
        %v622 = vpack.c.bf16 %v621, %v621
        %v623 = vld [vmem:[%s6] sm:$0x1]
        %v624 = vpack.c.bf16 %v623, %v623
        %v625 = vld [vmem:[%s8] sm:$0xf]
        %v626 = vpack.c.bf16 %v625, %v625
        %v627 = vld [vmem:[#allocation5] sm:$0x1]
        %v629 = vperm.slane %v627, 0
        %631 = vxpose.xlu0.c.b16.start [1/8] %v616, 128
        %632 = vxpose.xlu0.c.b16.cont [2/8] 0, 128
        %633 = vxpose.xlu0.c.b16.cont [3/8] 0, 128
        %634 = vxpose.xlu0.c.b16.cont [4/8] 0, 128
        %635 = vxpose.xlu0.c.b16.cont [5/8] 0, 128
        %636 = vxpose.xlu0.c.b16.cont [6/8] 0, 128
        %637 = vxpose.xlu0.c.b16.cont [7/8] 0, 128
        %638 = vxpose.xlu0.c.b16.end [8/8] 0, 128
        %v639 = vpop.trf.xlu0
        %v640 = vpop.trf.xlu0
        %v641 = vpop.trf.xlu0
        %v642 = vpop.trf.xlu0
        %v643 = vpop.trf.xlu0
        %v644 = vpop.trf.xlu0
        %v645 = vpop.trf.xlu0
        %v646 = vpop.trf.xlu0
        %vm647 = vcmask 31744
        %v649 = vsel %vm647, %v639, 0
        %v652 = vsel %vm647, %v640, 0
        %v655 = vsel %vm647, %v641, 0
        %v658 = vsel %vm647, %v642, 0
        %v661 = vsel %vm647, %v643, 0
        %v664 = vsel %vm647, %v644, 0
        %v667 = vsel %vm647, %v645, 0
        %v670 = vsel %vm647, %v646, 0
        %v673 = vsel %vm647, %v622, 0
        %675 = vmatpush.bf16.xpose.msra.mxu0 0
        %676 = vmatpush.bf16.xpose.msra.mxu0 0
        %677 = vmatpush.bf16.xpose.msra.mxu0 0
        %678 = vmatpush.bf16.xpose.msra.mxu0 0
        %679 = vmatpush.bf16.xpose.msra.mxu0 0
        %680 = vmatpush.bf16.xpose.msra.mxu0 0
        %681 = vmatpush.bf16.xpose.msra.mxu0 0
        %682 = vmatpush.bf16.xpose.msra.mxu0 %v673
        %683 = vmatmul.bf16.gmra.mxu0 %v649
        %v684 = vpop.f32.mrf.mxu0
        %v685 = vadd.f32 %v629, %v684
        %v686 = vpop.f32.mrf.mxu0
        %v687 = vadd.f32 %v629, %v686
        %688 = vmatmul.bf16.gmra.mxu0 %v652
        %v689 = vpop.f32.mrf.mxu0
        %v690 = vadd.f32 %v629, %v689
        %v691 = vpop.f32.mrf.mxu0
        %v692 = vadd.f32 %v629, %v691
        %693 = vmatmul.bf16.gmra.mxu0 %v655
        %v694 = vpop.f32.mrf.mxu0
        %v695 = vadd.f32 %v629, %v694
        %v696 = vpop.f32.mrf.mxu0
        %v697 = vadd.f32 %v629, %v696
        %698 = vmatmul.bf16.gmra.mxu0 %v658
        %v699 = vpop.f32.mrf.mxu0
        %v700 = vadd.f32 %v629, %v699
        %v701 = vpop.f32.mrf.mxu0
        %v702 = vadd.f32 %v629, %v701
        %703 = vmatmul.bf16.gmra.mxu0 %v661
        %v704 = vpop.f32.mrf.mxu0
        %v705 = vadd.f32 %v629, %v704
        %v706 = vpop.f32.mrf.mxu0
        %v707 = vadd.f32 %v629, %v706
        %708 = vmatmul.bf16.gmra.mxu0 %v664
        %v709 = vpop.f32.mrf.mxu0
        %v710 = vadd.f32 %v629, %v709
        %v711 = vpop.f32.mrf.mxu0
        %v712 = vadd.f32 %v629, %v711
        %713 = vmatmul.bf16.gmra.mxu0 %v667
        %v714 = vpop.f32.mrf.mxu0
        %v715 = vadd.f32 %v629, %v714
        %v716 = vpop.f32.mrf.mxu0
        %v717 = vadd.f32 %v629, %v716
        %718 = vmatmul.bf16.gmra.mxu0 %v670
        %v719 = vpop.f32.mrf.mxu0
        %v720 = vadd.f32 %v629, %v719
        %v721 = vpop.f32.mrf.mxu0
        %v722 = vadd.f32 %v629, %v721
        %723 = vdwg.mxu0
        %v724 = vld [vmem:[#allocation6] sm:$0x1]
        %726 = vset.pattern.permute.xlu0 0
        %727 = vperm.xlu0 %726, %v724
        %v728 = vpop.permute.xlu0 %727
        %v730 = vperm.slane %v728, 0
        %v732 = vsel %vm647, %v624, 0
        %vm734 = vcmask 1041408
        %v736 = vsel %vm734, %v618, 0
        %738 = vmatpush.bf16.msra.mxu0 0
        %739 = vmatpush.bf16.msra.mxu0 0
        %740 = vmatpush.bf16.msra.mxu0 0
        %741 = vmatpush.bf16.msra.mxu0 0
        %742 = vmatpush.bf16.msra.mxu0 0
        %743 = vmatpush.bf16.msra.mxu0 0
        %744 = vmatpush.bf16.msra.mxu0 0
        %745 = vmatpush.bf16.msra.mxu0 %v736
        %746 = vmatmul.bf16.gmra.mxu0 %v732
        %v747 = vpop.f32.mrf.mxu0
        %v748 = vadd.f32 %v730, %v747
        %v749 = vpop.f32.mrf.mxu0
        %750 = vdwg.mxu0
        %v751 = vld [vmem:[%s9] sm:$0x1]
        %v753 = vperm.slane %v751, 0
        %755 = vxpose.xlu0.c.b16.start [1/8] %v620, 128
        %756 = vxpose.xlu0.c.b16.cont [2/8] 0, 128
        %757 = vxpose.xlu0.c.b16.cont [3/8] 0, 128
        %758 = vxpose.xlu0.c.b16.cont [4/8] 0, 128
        %759 = vxpose.xlu0.c.b16.cont [5/8] 0, 128
        %760 = vxpose.xlu0.c.b16.cont [6/8] 0, 128
        %761 = vxpose.xlu0.c.b16.cont [7/8] 0, 128
        %762 = vxpose.xlu0.c.b16.end [8/8] 0, 128
        %v763 = vpop.trf.xlu0
        %v764 = vpop.trf.xlu0
        %v765 = vpop.trf.xlu0
        %v766 = vpop.trf.xlu0
        %v767 = vpop.trf.xlu0
        %v768 = vpop.trf.xlu0
        %v769 = vpop.trf.xlu0
        %v770 = vpop.trf.xlu0
        %v772 = vsel %vm647, %v763, 0
        %v775 = vsel %vm647, %v764, 0
        %v778 = vsel %vm647, %v765, 0
        %v781 = vsel %vm647, %v766, 0
        %v784 = vsel %vm647, %v767, 0
        %v787 = vsel %vm647, %v768, 0
        %v790 = vsel %vm647, %v769, 0
        %v793 = vsel %vm647, %v770, 0
        %v796 = vsel %vm647, %v626, 0
        %798 = vmatpush.bf16.xpose.msra.mxu0 0
        %799 = vmatpush.bf16.xpose.msra.mxu0 0
        %800 = vmatpush.bf16.xpose.msra.mxu0 0
        %801 = vmatpush.bf16.xpose.msra.mxu0 0
        %802 = vmatpush.bf16.xpose.msra.mxu0 0
        %803 = vmatpush.bf16.xpose.msra.mxu0 0
        %804 = vmatpush.bf16.xpose.msra.mxu0 0
        %805 = vmatpush.bf16.xpose.msra.mxu0 %v796
        %806 = vmatmul.bf16.gmra.mxu0 %v772
        %v807 = vpop.f32.mrf.mxu0
        %v808 = vadd.f32 %v753, %v807
        %v809 = vpop.f32.mrf.mxu0
        %v810 = vadd.f32 %v753, %v809
        %811 = vmatmul.bf16.gmra.mxu0 %v775
        %v812 = vpop.f32.mrf.mxu0
        %v813 = vadd.f32 %v753, %v812
        %v814 = vpop.f32.mrf.mxu0
        %v815 = vadd.f32 %v753, %v814
        %816 = vmatmul.bf16.gmra.mxu0 %v778
        %v817 = vpop.f32.mrf.mxu0
        %v818 = vadd.f32 %v753, %v817
        %v819 = vpop.f32.mrf.mxu0
        %v820 = vadd.f32 %v753, %v819
        %821 = vmatmul.bf16.gmra.mxu0 %v781
        %v822 = vpop.f32.mrf.mxu0
        %v823 = vadd.f32 %v753, %v822
        %v824 = vpop.f32.mrf.mxu0
        %v825 = vadd.f32 %v753, %v824
        %826 = vmatmul.bf16.gmra.mxu0 %v784
        %v827 = vpop.f32.mrf.mxu0
        %v828 = vadd.f32 %v753, %v827
        %v829 = vpop.f32.mrf.mxu0
        %v830 = vadd.f32 %v753, %v829
        %831 = vmatmul.bf16.gmra.mxu0 %v787
        %v832 = vpop.f32.mrf.mxu0
        %v833 = vadd.f32 %v753, %v832
        %v834 = vpop.f32.mrf.mxu0
        %v835 = vadd.f32 %v753, %v834
        %836 = vmatmul.bf16.gmra.mxu0 %v790
        %v837 = vpop.f32.mrf.mxu0
        %v838 = vadd.f32 %v753, %v837
        %v839 = vpop.f32.mrf.mxu0
        %v840 = vadd.f32 %v753, %v839
        %841 = vmatmul.bf16.gmra.mxu0 %v793
        %v842 = vpop.f32.mrf.mxu0
        %v843 = vadd.f32 %v753, %v842
        %v844 = vpop.f32.mrf.mxu0
        %v845 = vadd.f32 %v753, %v844
        %846 = vdwg.mxu0
        %v847 = vpack.c.bf16 %v687, %v685
        %v848 = vpack.c.bf16 %v692, %v690
        %v849 = vpack.c.bf16 %v697, %v695
        %v850 = vpack.c.bf16 %v702, %v700
        %v851 = vpack.c.bf16 %v707, %v705
        %v852 = vpack.c.bf16 %v712, %v710
        %v853 = vpack.c.bf16 %v717, %v715
        %v854 = vpack.c.bf16 %v722, %v720
        %v855 = vpack.c.bf16 %v748, %v748
        %vm856 = vcmask 7168
        %v858 = vsel %vm856, %v847, 0
        %v861 = vsel %vm856, %v848, 0
        %v864 = vsel %vm856, %v849, 0
        %v867 = vsel %vm856, %v850, 0
        %v870 = vsel %vm856, %v851, 0
        %v873 = vsel %vm856, %v852, 0
        %v876 = vsel %vm856, %v853, 0
        %v879 = vsel %vm856, %v854, 0
        %vm881 = vcmask 1040384
        %v882 = vsel 0, 4294967295, 65535
        %v883 = vsel %vm881, %v882, 0
        %v885 = vand.u32 %v855, %v883
        %887 = vmatpush.bf16.msra.mxu0 0
        %888 = vmatpush.bf16.msra.mxu0 0
        %889 = vmatpush.bf16.msra.mxu0 0
        %890 = vmatpush.bf16.msra.mxu0 0
        %891 = vmatpush.bf16.msra.mxu0 0
        %892 = vmatpush.bf16.msra.mxu0 0
        %893 = vmatpush.bf16.msra.mxu0 0
        %894 = vmatpush.bf16.msra.mxu0 %v885
        %895 = vmatmul.bf16.gmra.mxu0 %v858
        %v896 = vpop.f32.mrf.mxu0
        %v897 = vadd.f32 0.0, %v896
        %v898 = vpop.f32.mrf.mxu0
        %v899 = vadd.f32 0.0, %v898
        %900 = vmatmul.bf16.gmra.mxu0 %v861
        %v901 = vpop.f32.mrf.mxu0
        %v902 = vadd.f32 0.0, %v901
        %v903 = vpop.f32.mrf.mxu0
        %v904 = vadd.f32 0.0, %v903
        %905 = vmatmul.bf16.gmra.mxu0 %v864
        %v906 = vpop.f32.mrf.mxu0
        %v907 = vadd.f32 0.0, %v906
        %v908 = vpop.f32.mrf.mxu0
        %v909 = vadd.f32 0.0, %v908
        %910 = vmatmul.bf16.gmra.mxu0 %v867
        %v911 = vpop.f32.mrf.mxu0
        %v912 = vadd.f32 0.0, %v911
        %v913 = vpop.f32.mrf.mxu0
        %v914 = vadd.f32 0.0, %v913
        %915 = vmatmul.bf16.gmra.mxu0 %v870
        %v916 = vpop.f32.mrf.mxu0
        %v917 = vadd.f32 0.0, %v916
        %v918 = vpop.f32.mrf.mxu0
        %v919 = vadd.f32 0.0, %v918
        %920 = vmatmul.bf16.gmra.mxu0 %v873
        %v921 = vpop.f32.mrf.mxu0
        %v922 = vadd.f32 0.0, %v921
        %v923 = vpop.f32.mrf.mxu0
        %v924 = vadd.f32 0.0, %v923
        %925 = vmatmul.bf16.gmra.mxu0 %v876
        %v926 = vpop.f32.mrf.mxu0
        %v927 = vadd.f32 0.0, %v926
        %v928 = vpop.f32.mrf.mxu0
        %v929 = vadd.f32 0.0, %v928
        %930 = vmatmul.bf16.gmra.mxu0 %v879
        %v931 = vpop.f32.mrf.mxu0
        %v932 = vadd.f32 0.0, %v931
        %v933 = vpop.f32.mrf.mxu0
        %v934 = vadd.f32 0.0, %v933
        %935 = vdwg.mxu0
        %v936 = vld [vmem:[#allocation2] sm:$0xff]
        %v937 = vld [vmem:[#allocation2 + $0x8] sm:$0xff]
        %v938 = vld [vmem:[#allocation2 + $0x10] sm:$0xff]
        %v939 = vld [vmem:[#allocation2 + $0x18] sm:$0xff]
        %v940 = vld [vmem:[#allocation2 + $0x20] sm:$0xff]
        %v941 = vld [vmem:[#allocation2 + $0x28] sm:$0xff]
        %v942 = vld [vmem:[#allocation2 + $0x30] sm:$0xff]
        %v943 = vld [vmem:[#allocation2 + $0x38] sm:$0xff]
        %v944 = vld [vmem:[#allocation2 + $0x40] sm:$0xff]
        %v945 = vld [vmem:[#allocation2 + $0x48] sm:$0xff]
        %v946 = vld [vmem:[#allocation2 + $0x50] sm:$0xff]
        %v947 = vld [vmem:[#allocation2 + $0x58] sm:$0xff]
        %v948 = vld [vmem:[#allocation2 + $0x60] sm:$0xff]
        %v949 = vld [vmem:[#allocation2 + $0x68] sm:$0xff]
        %v950 = vld [vmem:[#allocation2 + $0x70] sm:$0xff]
        %v951 = vld [vmem:[#allocation2 + $0x78] sm:$0xff]
        %952 = vmax.xlane.f32.xlu0 %v897
        %v953 = vpop.xlane.xlu0 %952
        %954 = vmax.xlane.f32.xlu0 %v899
        %v955 = vpop.xlane.xlu0 %954
        %956 = vmax.xlane.f32.xlu0 %v902
        %v957 = vpop.xlane.xlu0 %956
        %958 = vmax.xlane.f32.xlu0 %v904
        %v959 = vpop.xlane.xlu0 %958
        %960 = vmax.xlane.f32.xlu0 %v907
        %v961 = vpop.xlane.xlu0 %960
        %962 = vmax.xlane.f32.xlu0 %v909
        %v963 = vpop.xlane.xlu0 %962
        %964 = vmax.xlane.f32.xlu0 %v912
        %v965 = vpop.xlane.xlu0 %964
        %966 = vmax.xlane.f32.xlu0 %v914
        %v967 = vpop.xlane.xlu0 %966
        %968 = vmax.xlane.f32.xlu0 %v917
        %v969 = vpop.xlane.xlu0 %968
        %970 = vmax.xlane.f32.xlu0 %v919
        %v971 = vpop.xlane.xlu0 %970
        %972 = vmax.xlane.f32.xlu0 %v922
        %v973 = vpop.xlane.xlu0 %972
        %974 = vmax.xlane.f32.xlu0 %v924
        %v975 = vpop.xlane.xlu0 %974
        %976 = vmax.xlane.f32.xlu0 %v927
        %v977 = vpop.xlane.xlu0 %976
        %978 = vmax.xlane.f32.xlu0 %v929
        %v979 = vpop.xlane.xlu0 %978
        %980 = vmax.xlane.f32.xlu0 %v932
        %v981 = vpop.xlane.xlu0 %980
        %982 = vmax.xlane.f32.xlu0 %v934
        %v983 = vpop.xlane.xlu0 %982
        %v984 = vmax.f32 %v936, %v953
        %v985 = vmax.f32 %v937, %v955
        %v986 = vmax.f32 %v938, %v957
        %v987 = vmax.f32 %v939, %v959
        %v988 = vmax.f32 %v940, %v961
        %v989 = vmax.f32 %v941, %v963
        %v990 = vmax.f32 %v942, %v965
        %v991 = vmax.f32 %v943, %v967
        %v992 = vmax.f32 %v944, %v969
        %v993 = vmax.f32 %v945, %v971
        %v994 = vmax.f32 %v946, %v973
        %v995 = vmax.f32 %v947, %v975
        %v996 = vmax.f32 %v948, %v977
        %v997 = vmax.f32 %v949, %v979
        %v998 = vmax.f32 %v950, %v981
        %v999 = vmax.f32 %v951, %v983
        %v1000 = vsub.f32 %v936, %v984
        %v1001 = vsub.f32 %v937, %v985
        %v1002 = vsub.f32 %v938, %v986
        %v1003 = vsub.f32 %v939, %v987
        %v1004 = vsub.f32 %v940, %v988
        %v1005 = vsub.f32 %v941, %v989
        %v1006 = vsub.f32 %v942, %v990
        %v1007 = vsub.f32 %v943, %v991
        %v1008 = vsub.f32 %v944, %v992
        %v1009 = vsub.f32 %v945, %v993
        %v1010 = vsub.f32 %v946, %v994
        %v1011 = vsub.f32 %v947, %v995
        %v1012 = vsub.f32 %v948, %v996
        %v1013 = vsub.f32 %v949, %v997
        %v1014 = vsub.f32 %v950, %v998
        %v1015 = vsub.f32 %v951, %v999
        %v1016 = vmul.f32 %v1000, 1.442695
        %v1017 = vpow.pop %v1016
        %v1018 = vmul.f32 %v1001, 1.442695
        %v1019 = vpow.pop %v1018
        %v1020 = vmul.f32 %v1002, 1.442695
        %v1021 = vpow.pop %v1020
        %v1022 = vmul.f32 %v1003, 1.442695
        %v1023 = vpow.pop %v1022
        %v1024 = vmul.f32 %v1004, 1.442695
        %v1025 = vpow.pop %v1024
        %v1026 = vmul.f32 %v1005, 1.442695
        %v1027 = vpow.pop %v1026
        %v1028 = vmul.f32 %v1006, 1.442695
        %v1029 = vpow.pop %v1028
        %v1030 = vmul.f32 %v1007, 1.442695
        %v1031 = vpow.pop %v1030
        %v1032 = vmul.f32 %v1008, 1.442695
        %v1033 = vpow.pop %v1032
        %v1034 = vmul.f32 %v1009, 1.442695
        %v1035 = vpow.pop %v1034
        %v1036 = vmul.f32 %v1010, 1.442695
        %v1037 = vpow.pop %v1036
        %v1038 = vmul.f32 %v1011, 1.442695
        %v1039 = vpow.pop %v1038
        %v1040 = vmul.f32 %v1012, 1.442695
        %v1041 = vpow.pop %v1040
        %v1042 = vmul.f32 %v1013, 1.442695
        %v1043 = vpow.pop %v1042
        %v1044 = vmul.f32 %v1014, 1.442695
        %v1045 = vpow.pop %v1044
        %v1046 = vmul.f32 %v1015, 1.442695
        %v1047 = vpow.pop %v1046
        %1049 = vset.pattern.permute.xlu0 0
        %1050 = vperm.xlu0 %1049, %v984
        %v1051 = vpop.permute.xlu0 %1050
        %1054 = vset.pattern.permute.xlu0 0
        %1055 = vperm.xlu0 %1054, %v985
        %v1056 = vpop.permute.xlu0 %1055
        %1059 = vset.pattern.permute.xlu0 0
        %1060 = vperm.xlu0 %1059, %v986
        %v1061 = vpop.permute.xlu0 %1060
        %1064 = vset.pattern.permute.xlu0 0
        %1065 = vperm.xlu0 %1064, %v987
        %v1066 = vpop.permute.xlu0 %1065
        %1069 = vset.pattern.permute.xlu0 0
        %1070 = vperm.xlu0 %1069, %v988
        %v1071 = vpop.permute.xlu0 %1070
        %1074 = vset.pattern.permute.xlu0 0
        %1075 = vperm.xlu0 %1074, %v989
        %v1076 = vpop.permute.xlu0 %1075
        %1079 = vset.pattern.permute.xlu0 0
        %1080 = vperm.xlu0 %1079, %v990
        %v1081 = vpop.permute.xlu0 %1080
        %1084 = vset.pattern.permute.xlu0 0
        %1085 = vperm.xlu0 %1084, %v991
        %v1086 = vpop.permute.xlu0 %1085
        %1089 = vset.pattern.permute.xlu0 0
        %1090 = vperm.xlu0 %1089, %v992
        %v1091 = vpop.permute.xlu0 %1090
        %1094 = vset.pattern.permute.xlu0 0
        %1095 = vperm.xlu0 %1094, %v993
        %v1096 = vpop.permute.xlu0 %1095
        %1099 = vset.pattern.permute.xlu0 0
        %1100 = vperm.xlu0 %1099, %v994
        %v1101 = vpop.permute.xlu0 %1100
        %1104 = vset.pattern.permute.xlu0 0
        %1105 = vperm.xlu0 %1104, %v995
        %v1106 = vpop.permute.xlu0 %1105
        %1109 = vset.pattern.permute.xlu0 0
        %1110 = vperm.xlu0 %1109, %v996
        %v1111 = vpop.permute.xlu0 %1110
        %1114 = vset.pattern.permute.xlu0 0
        %1115 = vperm.xlu0 %1114, %v997
        %v1116 = vpop.permute.xlu0 %1115
        %1119 = vset.pattern.permute.xlu0 0
        %1120 = vperm.xlu0 %1119, %v998
        %v1121 = vpop.permute.xlu0 %1120
        %1124 = vset.pattern.permute.xlu0 0
        %1125 = vperm.xlu0 %1124, %v999
        %v1126 = vpop.permute.xlu0 %1125
        %v1128 = vsub.f32 %v897, %v1051
        %v1129 = vsub.f32 %v899, %v1056
        %v1130 = vsub.f32 %v902, %v1061
        %v1131 = vsub.f32 %v904, %v1066
        %v1132 = vsub.f32 %v907, %v1071
        %v1133 = vsub.f32 %v909, %v1076
        %v1134 = vsub.f32 %v912, %v1081
        %v1135 = vsub.f32 %v914, %v1086
        %v1136 = vsub.f32 %v917, %v1091
        %v1137 = vsub.f32 %v919, %v1096
        %v1138 = vsub.f32 %v922, %v1101
        %v1139 = vsub.f32 %v924, %v1106
        %v1140 = vsub.f32 %v927, %v1111
        %v1141 = vsub.f32 %v929, %v1116
        %v1142 = vsub.f32 %v932, %v1121
        %v1143 = vsub.f32 %v934, %v1126
        %v1144 = vmul.f32 %v1128, 1.442695
        %v1145 = vpow.pop %v1144
        %v1146 = vmul.f32 %v1129, 1.442695
        %v1147 = vpow.pop %v1146
        %v1148 = vmul.f32 %v1130, 1.442695
        %v1149 = vpow.pop %v1148
        %v1150 = vmul.f32 %v1131, 1.442695
        %v1151 = vpow.pop %v1150
        %v1152 = vmul.f32 %v1132, 1.442695
        %v1153 = vpow.pop %v1152
        %v1154 = vmul.f32 %v1133, 1.442695
        %v1155 = vpow.pop %v1154
        %v1156 = vmul.f32 %v1134, 1.442695
        %v1157 = vpow.pop %v1156
        %v1158 = vmul.f32 %v1135, 1.442695
        %v1159 = vpow.pop %v1158
        %v1160 = vmul.f32 %v1136, 1.442695
        %v1161 = vpow.pop %v1160
        %v1162 = vmul.f32 %v1137, 1.442695
        %v1163 = vpow.pop %v1162
        %v1164 = vmul.f32 %v1138, 1.442695
        %v1165 = vpow.pop %v1164
        %v1166 = vmul.f32 %v1139, 1.442695
        %v1167 = vpow.pop %v1166
        %v1168 = vmul.f32 %v1140, 1.442695
        %v1169 = vpow.pop %v1168
        %v1170 = vmul.f32 %v1141, 1.442695
        %v1171 = vpow.pop %v1170
        %v1172 = vmul.f32 %v1142, 1.442695
        %v1173 = vpow.pop %v1172
        %v1174 = vmul.f32 %v1143, 1.442695
        %v1175 = vpow.pop %v1174
        %v1176 = vld [vmem:[#allocation3] sm:$0xff]
        %v1177 = vld [vmem:[#allocation3 + $0x8] sm:$0xff]
        %v1178 = vld [vmem:[#allocation3 + $0x10] sm:$0xff]
        %v1179 = vld [vmem:[#allocation3 + $0x18] sm:$0xff]
        %v1180 = vld [vmem:[#allocation3 + $0x20] sm:$0xff]
        %v1181 = vld [vmem:[#allocation3 + $0x28] sm:$0xff]
        %v1182 = vld [vmem:[#allocation3 + $0x30] sm:$0xff]
        %v1183 = vld [vmem:[#allocation3 + $0x38] sm:$0xff]
        %v1184 = vld [vmem:[#allocation3 + $0x40] sm:$0xff]
        %v1185 = vld [vmem:[#allocation3 + $0x48] sm:$0xff]
        %v1186 = vld [vmem:[#allocation3 + $0x50] sm:$0xff]
        %v1187 = vld [vmem:[#allocation3 + $0x58] sm:$0xff]
        %v1188 = vld [vmem:[#allocation3 + $0x60] sm:$0xff]
        %v1189 = vld [vmem:[#allocation3 + $0x68] sm:$0xff]
        %v1190 = vld [vmem:[#allocation3 + $0x70] sm:$0xff]
        %v1191 = vld [vmem:[#allocation3 + $0x78] sm:$0xff]
        %v1192 = vmul.f32 %v1017, %v1176
        %v1193 = vmul.f32 %v1019, %v1177
        %v1194 = vmul.f32 %v1021, %v1178
        %v1195 = vmul.f32 %v1023, %v1179
        %v1196 = vmul.f32 %v1025, %v1180
        %v1197 = vmul.f32 %v1027, %v1181
        %v1198 = vmul.f32 %v1029, %v1182
        %v1199 = vmul.f32 %v1031, %v1183
        %v1200 = vmul.f32 %v1033, %v1184
        %v1201 = vmul.f32 %v1035, %v1185
        %v1202 = vmul.f32 %v1037, %v1186
        %v1203 = vmul.f32 %v1039, %v1187
        %v1204 = vmul.f32 %v1041, %v1188
        %v1205 = vmul.f32 %v1043, %v1189
        %v1206 = vmul.f32 %v1045, %v1190
        %v1207 = vmul.f32 %v1047, %v1191
        %1208 = vadd.xlane.f32.xlu0 %v1145
        %v1209 = vpop.xlane.xlu0 %1208
        %1210 = vadd.xlane.f32.xlu0 %v1147
        %v1211 = vpop.xlane.xlu0 %1210
        %1212 = vadd.xlane.f32.xlu0 %v1149
        %v1213 = vpop.xlane.xlu0 %1212
        %1214 = vadd.xlane.f32.xlu0 %v1151
        %v1215 = vpop.xlane.xlu0 %1214
        %1216 = vadd.xlane.f32.xlu0 %v1153
        %v1217 = vpop.xlane.xlu0 %1216
        %1218 = vadd.xlane.f32.xlu0 %v1155
        %v1219 = vpop.xlane.xlu0 %1218
        %1220 = vadd.xlane.f32.xlu0 %v1157
        %v1221 = vpop.xlane.xlu0 %1220
        %1222 = vadd.xlane.f32.xlu0 %v1159
        %v1223 = vpop.xlane.xlu0 %1222
        %1224 = vadd.xlane.f32.xlu0 %v1161
        %v1225 = vpop.xlane.xlu0 %1224
        %1226 = vadd.xlane.f32.xlu0 %v1163
        %v1227 = vpop.xlane.xlu0 %1226
        %1228 = vadd.xlane.f32.xlu0 %v1165
        %v1229 = vpop.xlane.xlu0 %1228
        %1230 = vadd.xlane.f32.xlu0 %v1167
        %v1231 = vpop.xlane.xlu0 %1230
        %1232 = vadd.xlane.f32.xlu0 %v1169
        %v1233 = vpop.xlane.xlu0 %1232
        %1234 = vadd.xlane.f32.xlu0 %v1171
        %v1235 = vpop.xlane.xlu0 %1234
        %1236 = vadd.xlane.f32.xlu0 %v1173
        %v1237 = vpop.xlane.xlu0 %1236
        %1238 = vadd.xlane.f32.xlu0 %v1175
        %v1239 = vpop.xlane.xlu0 %1238
        %v1240 = vadd.f32 %v1192, %v1209
        %v1241 = vadd.f32 %v1193, %v1211
        %v1242 = vadd.f32 %v1194, %v1213
        %v1243 = vadd.f32 %v1195, %v1215
        %v1244 = vadd.f32 %v1196, %v1217
        %v1245 = vadd.f32 %v1197, %v1219
        %v1246 = vadd.f32 %v1198, %v1221
        %v1247 = vadd.f32 %v1199, %v1223
        %v1248 = vadd.f32 %v1200, %v1225
        %v1249 = vadd.f32 %v1201, %v1227
        %v1250 = vadd.f32 %v1202, %v1229
        %v1251 = vadd.f32 %v1203, %v1231
        %v1252 = vadd.f32 %v1204, %v1233
        %v1253 = vadd.f32 %v1205, %v1235
        %v1254 = vadd.f32 %v1206, %v1237
        %v1255 = vadd.f32 %v1207, %v1239
        %1256 = vst.msk [vmem:[#allocation3] sm:$0xff] %vm856, %v1240
        %1257 = vst.msk [vmem:[#allocation3 + $0x8] sm:$0xff] %vm856, %v1241
        %1258 = vst.msk [vmem:[#allocation3 + $0x10] sm:$0xff] %vm856, %v1242
        %1259 = vst.msk [vmem:[#allocation3 + $0x18] sm:$0xff] %vm856, %v1243
        %1260 = vst.msk [vmem:[#allocation3 + $0x20] sm:$0xff] %vm856, %v1244
        %1261 = vst.msk [vmem:[#allocation3 + $0x28] sm:$0xff] %vm856, %v1245
        %1262 = vst.msk [vmem:[#allocation3 + $0x30] sm:$0xff] %vm856, %v1246
        %1263 = vst.msk [vmem:[#allocation3 + $0x38] sm:$0xff] %vm856, %v1247
        %1264 = vst.msk [vmem:[#allocation3 + $0x40] sm:$0xff] %vm856, %v1248
        %1265 = vst.msk [vmem:[#allocation3 + $0x48] sm:$0xff] %vm856, %v1249
        %1266 = vst.msk [vmem:[#allocation3 + $0x50] sm:$0xff] %vm856, %v1250
        %1267 = vst.msk [vmem:[#allocation3 + $0x58] sm:$0xff] %vm856, %v1251
        %1268 = vst.msk [vmem:[#allocation3 + $0x60] sm:$0xff] %vm856, %v1252
        %1269 = vst.msk [vmem:[#allocation3 + $0x68] sm:$0xff] %vm856, %v1253
        %1270 = vst.msk [vmem:[#allocation3 + $0x70] sm:$0xff] %vm856, %v1254
        %1271 = vst.msk [vmem:[#allocation3 + $0x78] sm:$0xff] %vm856, %v1255
        %v1272 = vld [vmem:[#allocation4] sm:$0xff]
        %v1273 = vld [vmem:[#allocation4 + $0x8] sm:$0xff]
        %v1274 = vld [vmem:[#allocation4 + $0x10] sm:$0xff]
        %v1275 = vld [vmem:[#allocation4 + $0x18] sm:$0xff]
        %v1276 = vld [vmem:[#allocation4 + $0x20] sm:$0xff]
        %v1277 = vld [vmem:[#allocation4 + $0x28] sm:$0xff]
        %v1278 = vld [vmem:[#allocation4 + $0x30] sm:$0xff]
        %v1279 = vld [vmem:[#allocation4 + $0x38] sm:$0xff]
        %v1280 = vld [vmem:[#allocation4 + $0x40] sm:$0xff]
        %v1281 = vld [vmem:[#allocation4 + $0x48] sm:$0xff]
        %v1282 = vld [vmem:[#allocation4 + $0x50] sm:$0xff]
        %v1283 = vld [vmem:[#allocation4 + $0x58] sm:$0xff]
        %v1284 = vld [vmem:[#allocation4 + $0x60] sm:$0xff]
        %v1285 = vld [vmem:[#allocation4 + $0x68] sm:$0xff]
        %v1286 = vld [vmem:[#allocation4 + $0x70] sm:$0xff]
        %v1287 = vld [vmem:[#allocation4 + $0x78] sm:$0xff]
        %1289 = vset.pattern.permute.xlu0 0
        %1290 = vperm.xlu0 %1289, %v1017
        %v1291 = vpop.permute.xlu0 %1290
        %1294 = vset.pattern.permute.xlu0 0
        %1295 = vperm.xlu0 %1294, %v1019
        %v1296 = vpop.permute.xlu0 %1295
        %1299 = vset.pattern.permute.xlu0 0
        %1300 = vperm.xlu0 %1299, %v1021
        %v1301 = vpop.permute.xlu0 %1300
        %1304 = vset.pattern.permute.xlu0 0
        %1305 = vperm.xlu0 %1304, %v1023
        %v1306 = vpop.permute.xlu0 %1305
        %1309 = vset.pattern.permute.xlu0 0
        %1310 = vperm.xlu0 %1309, %v1025
        %v1311 = vpop.permute.xlu0 %1310
        %1314 = vset.pattern.permute.xlu0 0
        %1315 = vperm.xlu0 %1314, %v1027
        %v1316 = vpop.permute.xlu0 %1315
        %1319 = vset.pattern.permute.xlu0 0
        %1320 = vperm.xlu0 %1319, %v1029
        %v1321 = vpop.permute.xlu0 %1320
        %1324 = vset.pattern.permute.xlu0 0
        %1325 = vperm.xlu0 %1324, %v1031
        %v1326 = vpop.permute.xlu0 %1325
        %1329 = vset.pattern.permute.xlu0 0
        %1330 = vperm.xlu0 %1329, %v1033
        %v1331 = vpop.permute.xlu0 %1330
        %1334 = vset.pattern.permute.xlu0 0
        %1335 = vperm.xlu0 %1334, %v1035
        %v1336 = vpop.permute.xlu0 %1335
        %1339 = vset.pattern.permute.xlu0 0
        %1340 = vperm.xlu0 %1339, %v1037
        %v1341 = vpop.permute.xlu0 %1340
        %1344 = vset.pattern.permute.xlu0 0
        %1345 = vperm.xlu0 %1344, %v1039
        %v1346 = vpop.permute.xlu0 %1345
        %1349 = vset.pattern.permute.xlu0 0
        %1350 = vperm.xlu0 %1349, %v1041
        %v1351 = vpop.permute.xlu0 %1350
        %1354 = vset.pattern.permute.xlu0 0
        %1355 = vperm.xlu0 %1354, %v1043
        %v1356 = vpop.permute.xlu0 %1355
        %1359 = vset.pattern.permute.xlu0 0
        %1360 = vperm.xlu0 %1359, %v1045
        %v1361 = vpop.permute.xlu0 %1360
        %1364 = vset.pattern.permute.xlu0 0
        %1365 = vperm.xlu0 %1364, %v1047
        %v1366 = vpop.permute.xlu0 %1365
        %v1368 = vmul.f32 %v1291, %v1272
        %v1369 = vmul.f32 %v1296, %v1273
        %v1370 = vmul.f32 %v1301, %v1274
        %v1371 = vmul.f32 %v1306, %v1275
        %v1372 = vmul.f32 %v1311, %v1276
        %v1373 = vmul.f32 %v1316, %v1277
        %v1374 = vmul.f32 %v1321, %v1278
        %v1375 = vmul.f32 %v1326, %v1279
        %v1376 = vmul.f32 %v1331, %v1280
        %v1377 = vmul.f32 %v1336, %v1281
        %v1378 = vmul.f32 %v1341, %v1282
        %v1379 = vmul.f32 %v1346, %v1283
        %v1380 = vmul.f32 %v1351, %v1284
        %v1381 = vmul.f32 %v1356, %v1285
        %v1382 = vmul.f32 %v1361, %v1286
        %v1383 = vmul.f32 %v1366, %v1287
        %v1384 = vpack.c.bf16 %v1147, %v1145
        %v1385 = vpack.c.bf16 %v1151, %v1149
        %v1386 = vpack.c.bf16 %v1155, %v1153
        %v1387 = vpack.c.bf16 %v1159, %v1157
        %v1388 = vpack.c.bf16 %v1163, %v1161
        %v1389 = vpack.c.bf16 %v1167, %v1165
        %v1390 = vpack.c.bf16 %v1171, %v1169
        %v1391 = vpack.c.bf16 %v1175, %v1173
        %v1392 = vpack.c.bf16 %v810, %v808
        %v1393 = vpack.c.bf16 %v815, %v813
        %v1394 = vpack.c.bf16 %v820, %v818
        %v1395 = vpack.c.bf16 %v825, %v823
        %v1396 = vpack.c.bf16 %v830, %v828
        %v1397 = vpack.c.bf16 %v835, %v833
        %v1398 = vpack.c.bf16 %v840, %v838
        %v1399 = vpack.c.bf16 %v845, %v843
        %1400 = vmatpush.bf16.msra.mxu0 %v1399
        %1401 = vmatpush.bf16.msra.mxu0 %v1398
        %1402 = vmatpush.bf16.msra.mxu0 %v1397
        %1403 = vmatpush.bf16.msra.mxu0 %v1396
        %1404 = vmatpush.bf16.msra.mxu0 %v1395
        %1405 = vmatpush.bf16.msra.mxu0 %v1394
        %1406 = vmatpush.bf16.msra.mxu0 %v1393
        %1407 = vmatpush.bf16.msra.mxu0 %v1392
        %1408 = vmatmul.bf16.gmra.mxu0 %v1384
        %v1409 = vpop.f32.mrf.mxu0
        %v1410 = vadd.f32 0.0, %v1409
        %v1411 = vpop.f32.mrf.mxu0
        %v1412 = vadd.f32 0.0, %v1411
        %1413 = vmatmul.bf16.gmra.mxu0 %v1385
        %v1414 = vpop.f32.mrf.mxu0
        %v1415 = vadd.f32 0.0, %v1414
        %v1416 = vpop.f32.mrf.mxu0
        %v1417 = vadd.f32 0.0, %v1416
        %1418 = vmatmul.bf16.gmra.mxu0 %v1386
        %v1419 = vpop.f32.mrf.mxu0
        %v1420 = vadd.f32 0.0, %v1419
        %v1421 = vpop.f32.mrf.mxu0
        %v1422 = vadd.f32 0.0, %v1421
        %1423 = vmatmul.bf16.gmra.mxu0 %v1387
        %v1424 = vpop.f32.mrf.mxu0
        %v1425 = vadd.f32 0.0, %v1424
        %v1426 = vpop.f32.mrf.mxu0
        %v1427 = vadd.f32 0.0, %v1426
        %1428 = vmatmul.bf16.gmra.mxu0 %v1388
        %v1429 = vpop.f32.mrf.mxu0
        %v1430 = vadd.f32 0.0, %v1429
        %v1431 = vpop.f32.mrf.mxu0
        %v1432 = vadd.f32 0.0, %v1431
        %1433 = vmatmul.bf16.gmra.mxu0 %v1389
        %v1434 = vpop.f32.mrf.mxu0
        %v1435 = vadd.f32 0.0, %v1434
        %v1436 = vpop.f32.mrf.mxu0
        %v1437 = vadd.f32 0.0, %v1436
        %1438 = vmatmul.bf16.gmra.mxu0 %v1390
        %v1439 = vpop.f32.mrf.mxu0
        %v1440 = vadd.f32 0.0, %v1439
        %v1441 = vpop.f32.mrf.mxu0
        %v1442 = vadd.f32 0.0, %v1441
        %1443 = vmatmul.bf16.gmra.mxu0 %v1391
        %v1444 = vpop.f32.mrf.mxu0
        %v1445 = vadd.f32 0.0, %v1444
        %v1446 = vpop.f32.mrf.mxu0
        %v1447 = vadd.f32 0.0, %v1446
        %1448 = vdwg.mxu0
        %v1449 = vadd.f32 %v1368, %v1410
        %v1450 = vadd.f32 %v1369, %v1412
        %v1451 = vadd.f32 %v1370, %v1415
        %v1452 = vadd.f32 %v1371, %v1417
        %v1453 = vadd.f32 %v1372, %v1420
        %v1454 = vadd.f32 %v1373, %v1422
        %v1455 = vadd.f32 %v1374, %v1425
        %v1456 = vadd.f32 %v1375, %v1427
        %v1457 = vadd.f32 %v1376, %v1430
        %v1458 = vadd.f32 %v1377, %v1432
        %v1459 = vadd.f32 %v1378, %v1435
        %v1460 = vadd.f32 %v1379, %v1437
        %v1461 = vadd.f32 %v1380, %v1440
        %v1462 = vadd.f32 %v1381, %v1442
        %v1463 = vadd.f32 %v1382, %v1445
        %v1464 = vadd.f32 %v1383, %v1447
        %1465 = vst.msk [vmem:[#allocation4] sm:$0xff] %vm647, %v1449
        %1466 = vst.msk [vmem:[#allocation4 + $0x8] sm:$0xff] %vm647, %v1450
        %1467 = vst.msk [vmem:[#allocation4 + $0x10] sm:$0xff] %vm647, %v1451
        %1468 = vst.msk [vmem:[#allocation4 + $0x18] sm:$0xff] %vm647, %v1452
        %1469 = vst.msk [vmem:[#allocation4 + $0x20] sm:$0xff] %vm647, %v1453
        %1470 = vst.msk [vmem:[#allocation4 + $0x28] sm:$0xff] %vm647, %v1454
        %1471 = vst.msk [vmem:[#allocation4 + $0x30] sm:$0xff] %vm647, %v1455
        %1472 = vst.msk [vmem:[#allocation4 + $0x38] sm:$0xff] %vm647, %v1456
        %1473 = vst.msk [vmem:[#allocation4 + $0x40] sm:$0xff] %vm647, %v1457
        %1474 = vst.msk [vmem:[#allocation4 + $0x48] sm:$0xff] %vm647, %v1458
        %1475 = vst.msk [vmem:[#allocation4 + $0x50] sm:$0xff] %vm647, %v1459
        %1476 = vst.msk [vmem:[#allocation4 + $0x58] sm:$0xff] %vm647, %v1460
        %1477 = vst.msk [vmem:[#allocation4 + $0x60] sm:$0xff] %vm647, %v1461
        %1478 = vst.msk [vmem:[#allocation4 + $0x68] sm:$0xff] %vm647, %v1462
        %1479 = vst.msk [vmem:[#allocation4 + $0x70] sm:$0xff] %vm647, %v1463
        %1480 = vst.msk [vmem:[#allocation4 + $0x78] sm:$0xff] %vm647, %v1464
        %1481 = vst.msk [vmem:[#allocation2] sm:$0xff] %vm856, %v984
        %1482 = vst.msk [vmem:[#allocation2 + $0x8] sm:$0xff] %vm856, %v985
        %1483 = vst.msk [vmem:[#allocation2 + $0x10] sm:$0xff] %vm856, %v986
        %1484 = vst.msk [vmem:[#allocation2 + $0x18] sm:$0xff] %vm856, %v987
        %1485 = vst.msk [vmem:[#allocation2 + $0x20] sm:$0xff] %vm856, %v988
        %1486 = vst.msk [vmem:[#allocation2 + $0x28] sm:$0xff] %vm856, %v989
        %1487 = vst.msk [vmem:[#allocation2 + $0x30] sm:$0xff] %vm856, %v990
        %1488 = vst.msk [vmem:[#allocation2 + $0x38] sm:$0xff] %vm856, %v991
        %1489 = vst.msk [vmem:[#allocation2 + $0x40] sm:$0xff] %vm856, %v992
        %1490 = vst.msk [vmem:[#allocation2 + $0x48] sm:$0xff] %vm856, %v993
        %1491 = vst.msk [vmem:[#allocation2 + $0x50] sm:$0xff] %vm856, %v994
        %1492 = vst.msk [vmem:[#allocation2 + $0x58] sm:$0xff] %vm856, %v995
        %1493 = vst.msk [vmem:[#allocation2 + $0x60] sm:$0xff] %vm856, %v996
        %1494 = vst.msk [vmem:[#allocation2 + $0x68] sm:$0xff] %vm856, %v997
        %1495 = vst.msk [vmem:[#allocation2 + $0x70] sm:$0xff] %vm856, %v998
        %1496 = vst.msk [vmem:[#allocation2 + $0x78] sm:$0xff] %vm856, %v999
        %p1497 = scmp.eq.s32.totalorder %s46, 1
        // Predicated region
        $region85: #{tpu_custom_call.1} parent=63 // pred_check
          %p1498 = pneg %p1497
        $region86: #{tpu_custom_call.1} parent=63 // pred_check_branch
          %1500 = sbr.rel (%p1498) target = $region88
        $region87: #{tpu_custom_call.1} parent=63 // pred_region
          %v1501 = vld [vmem:[#allocation3] sm:$0xff]
          %v1502 = vld [vmem:[#allocation3 + $0x8] sm:$0xff]
          %v1503 = vld [vmem:[#allocation3 + $0x10] sm:$0xff]
          %v1504 = vld [vmem:[#allocation3 + $0x18] sm:$0xff]
          %v1505 = vld [vmem:[#allocation3 + $0x20] sm:$0xff]
          %v1506 = vld [vmem:[#allocation3 + $0x28] sm:$0xff]
          %v1507 = vld [vmem:[#allocation3 + $0x30] sm:$0xff]
          %v1508 = vld [vmem:[#allocation3 + $0x38] sm:$0xff]
          %v1509 = vld [vmem:[#allocation3 + $0x40] sm:$0xff]
          %v1510 = vld [vmem:[#allocation3 + $0x48] sm:$0xff]
          %v1511 = vld [vmem:[#allocation3 + $0x50] sm:$0xff]
          %v1512 = vld [vmem:[#allocation3 + $0x58] sm:$0xff]
          %v1513 = vld [vmem:[#allocation3 + $0x60] sm:$0xff]
          %v1514 = vld [vmem:[#allocation3 + $0x68] sm:$0xff]
          %v1515 = vld [vmem:[#allocation3 + $0x70] sm:$0xff]
          %v1516 = vld [vmem:[#allocation3 + $0x78] sm:$0xff]
          %v1517 = vrcp.pop %v1501
          %v1518 = vrcp.pop %v1502
          %v1519 = vrcp.pop %v1503
          %v1520 = vrcp.pop %v1504
          %v1521 = vrcp.pop %v1505
          %v1522 = vrcp.pop %v1506
          %v1523 = vrcp.pop %v1507
          %v1524 = vrcp.pop %v1508
          %v1525 = vrcp.pop %v1509
          %v1526 = vrcp.pop %v1510
          %v1527 = vrcp.pop %v1511
          %v1528 = vrcp.pop %v1512
          %v1529 = vrcp.pop %v1513
          %v1530 = vrcp.pop %v1514
          %v1531 = vrcp.pop %v1515
          %v1532 = vrcp.pop %v1516
          %v1533 = vld [vmem:[#allocation4] sm:$0xff]
          %v1534 = vld [vmem:[#allocation4 + $0x8] sm:$0xff]
          %v1535 = vld [vmem:[#allocation4 + $0x10] sm:$0xff]
          %v1536 = vld [vmem:[#allocation4 + $0x18] sm:$0xff]
          %v1537 = vld [vmem:[#allocation4 + $0x20] sm:$0xff]
          %v1538 = vld [vmem:[#allocation4 + $0x28] sm:$0xff]
          %v1539 = vld [vmem:[#allocation4 + $0x30] sm:$0xff]
          %v1540 = vld [vmem:[#allocation4 + $0x38] sm:$0xff]
          %v1541 = vld [vmem:[#allocation4 + $0x40] sm:$0xff]
          %v1542 = vld [vmem:[#allocation4 + $0x48] sm:$0xff]
          %v1543 = vld [vmem:[#allocation4 + $0x50] sm:$0xff]
          %v1544 = vld [vmem:[#allocation4 + $0x58] sm:$0xff]
          %v1545 = vld [vmem:[#allocation4 + $0x60] sm:$0xff]
          %v1546 = vld [vmem:[#allocation4 + $0x68] sm:$0xff]
          %v1547 = vld [vmem:[#allocation4 + $0x70] sm:$0xff]
          %v1548 = vld [vmem:[#allocation4 + $0x78] sm:$0xff]
          %1550 = vset.pattern.permute.xlu0 0
          %1551 = vperm.xlu0 %1550, %v1517
          %v1552 = vpop.permute.xlu0 %1551
          %1555 = vset.pattern.permute.xlu0 0
          %1556 = vperm.xlu0 %1555, %v1518
          %v1557 = vpop.permute.xlu0 %1556
          %1560 = vset.pattern.permute.xlu0 0
          %1561 = vperm.xlu0 %1560, %v1519
          %v1562 = vpop.permute.xlu0 %1561
          %1565 = vset.pattern.permute.xlu0 0
          %1566 = vperm.xlu0 %1565, %v1520
          %v1567 = vpop.permute.xlu0 %1566
          %1570 = vset.pattern.permute.xlu0 0
          %1571 = vperm.xlu0 %1570, %v1521
          %v1572 = vpop.permute.xlu0 %1571
          %1575 = vset.pattern.permute.xlu0 0
          %1576 = vperm.xlu0 %1575, %v1522
          %v1577 = vpop.permute.xlu0 %1576
          %1580 = vset.pattern.permute.xlu0 0
          %1581 = vperm.xlu0 %1580, %v1523
          %v1582 = vpop.permute.xlu0 %1581
          %1585 = vset.pattern.permute.xlu0 0
          %1586 = vperm.xlu0 %1585, %v1524
          %v1587 = vpop.permute.xlu0 %1586
          %1590 = vset.pattern.permute.xlu0 0
          %1591 = vperm.xlu0 %1590, %v1525
          %v1592 = vpop.permute.xlu0 %1591
          %1595 = vset.pattern.permute.xlu0 0
          %1596 = vperm.xlu0 %1595, %v1526
          %v1597 = vpop.permute.xlu0 %1596
          %1600 = vset.pattern.permute.xlu0 0
          %1601 = vperm.xlu0 %1600, %v1527
          %v1602 = vpop.permute.xlu0 %1601
          %1605 = vset.pattern.permute.xlu0 0
          %1606 = vperm.xlu0 %1605, %v1528
          %v1607 = vpop.permute.xlu0 %1606
          %1610 = vset.pattern.permute.xlu0 0
          %1611 = vperm.xlu0 %1610, %v1529
          %v1612 = vpop.permute.xlu0 %1611
          %1615 = vset.pattern.permute.xlu0 0
          %1616 = vperm.xlu0 %1615, %v1530
          %v1617 = vpop.permute.xlu0 %1616
          %1620 = vset.pattern.permute.xlu0 0
          %1621 = vperm.xlu0 %1620, %v1531
          %v1622 = vpop.permute.xlu0 %1621
          %1625 = vset.pattern.permute.xlu0 0
          %1626 = vperm.xlu0 %1625, %v1532
          %v1627 = vpop.permute.xlu0 %1626
          %v1629 = vmul.f32 %v1533, %v1552
          %v1630 = vmul.f32 %v1534, %v1557
          %v1631 = vmul.f32 %v1535, %v1562
          %v1632 = vmul.f32 %v1536, %v1567
          %v1633 = vmul.f32 %v1537, %v1572
          %v1634 = vmul.f32 %v1538, %v1577
          %v1635 = vmul.f32 %v1539, %v1582
          %v1636 = vmul.f32 %v1540, %v1587
          %v1637 = vmul.f32 %v1541, %v1592
          %v1638 = vmul.f32 %v1542, %v1597
          %v1639 = vmul.f32 %v1543, %v1602
          %v1640 = vmul.f32 %v1544, %v1607
          %v1641 = vmul.f32 %v1545, %v1612
          %v1642 = vmul.f32 %v1546, %v1617
          %v1643 = vmul.f32 %v1547, %v1622
          %v1644 = vmul.f32 %v1548, %v1627
          %1645 = vxpose.xlu0.b32.start [1/16] %v1629, 128
          %1646 = vxpose.xlu0.b32.cont [2/16] %v1630, 128
          %1647 = vxpose.xlu0.b32.cont [3/16] %v1631, 128
          %1648 = vxpose.xlu0.b32.cont [4/16] %v1632, 128
          %1649 = vxpose.xlu0.b32.cont [5/16] %v1633, 128
          %1650 = vxpose.xlu0.b32.cont [6/16] %v1634, 128
          %1651 = vxpose.xlu0.b32.cont [7/16] %v1635, 128
          %1652 = vxpose.xlu0.b32.cont [8/16] %v1636, 128
          %1653 = vxpose.xlu0.b32.cont [9/16] %v1637, 128
          %1654 = vxpose.xlu0.b32.cont [10/16] %v1638, 128
          %1655 = vxpose.xlu0.b32.cont [11/16] %v1639, 128
          %1656 = vxpose.xlu0.b32.cont [12/16] %v1640, 128
          %1657 = vxpose.xlu0.b32.cont [13/16] %v1641, 128
          %1658 = vxpose.xlu0.b32.cont [14/16] %v1642, 128
          %1659 = vxpose.xlu0.b32.cont [15/16] %v1643, 128
          %1660 = vxpose.xlu0.b32.end [16/16] %v1644, 128
          %v1661 = vpop.trf.xlu0
          %v1662 = vpop.trf.xlu0
          %v1663 = vpop.trf.xlu0
          %v1664 = vpop.trf.xlu0
          %v1665 = vpop.trf.xlu0
          %v1666 = vpop.trf.xlu0
          %v1667 = vpop.trf.xlu0
          %v1668 = vpop.trf.xlu0
          %v1669 = vpop.trf.xlu0
          %v1670 = vpop.trf.xlu0
          %v1671 = vpop.trf.xlu0
          %v1672 = vpop.trf.xlu0
          %v1673 = vpop.trf.xlu0
          %v1674 = vpop.trf.xlu0
          %v1675 = vpop.trf.xlu0
          %v1676 = vpop.trf.xlu0
          %s1677 = sld [smem:[#allocation7]]
          %v1678 = vstv %s1677
          %v1679 = vmul.f32 %v1678, %v1661
          %v1680 = vld [vmem:[%s485] sm:$0xf]
          %v1681 = vadd.f32 %v1679, %v1680
          %1682 = vst [vmem:[%s559] sm:$0xf] %v1681
        $region88: #{tpu_custom_call.1} parent=63 // pred_fallthru
          _
        %s1683 = sand.u32 %s327, 1
        %s1684 = scalar_lea.sflag [#allocation10], %s1683
        %s1685 = sand.u32 %s327, 1
        %s1686 = smul.addr %s1685, 4
        %s1687 = scalar_lea.vmem [#allocation16], %s1686
        // Predicated region
        $region89: #{tpu_custom_call.1} parent=63 // pred_check
          %p1688 = pneg %p337
        $region90: #{tpu_custom_call.1} parent=63 // pred_check_branch
          %1690 = sbr.rel (%p1688) target = $region92
        $region91: #{tpu_custom_call.1} parent=63 // pred_region
          %1692 = vsyncadd %s1684, 0
          %s1693 = smul.addr %s44, 2
          %s1694 = sadd.s32 %s45, %s1693
          %s1695 = smul.addr %s1694, 4
          %s1696 = scalar_lea.hbm %s11, %s1695
          %s1698 = sshll.u32 %s1687, 4
          %s1699 = int_to_ptr.vmem [resolvable:$true] %s1698
          %s1700 = sshll.u32 %s1696, 4
          %s1701 = int_to_ptr.hbm [resolvable:$true] %s1700
          %1703 = dma.vmem_to_hbm [thread:$0]  %s1699, 64, %s1701, %s1684
        $region92: #{tpu_custom_call.1} parent=63 // pred_fallthru
          _
      $region64: #{tpu_custom_call.1} parent=5 // pred_fallthru
        _
      %p1704 = scmp.le.s32.totalorder 2, %s34
      // Predicated region
      $region93: #{tpu_custom_call.1} parent=5 // pred_check
        %p1705 = pneg %p1704
      $region94: #{tpu_custom_call.1} parent=5 // pred_check_branch
        %1707 = sbr.rel (%p1705) target = $region96
      $region95: #{tpu_custom_call.1} parent=5 // pred_region
        %s1708 = ssub.s32 %s34, 2
        // Predicated region
        $region97: #{tpu_custom_call.1} parent=95 // pred_check
          %p1709 = pneg %p343
        $region98: #{tpu_custom_call.1} parent=95 // pred_check_branch
          %1711 = sbr.rel (%p1709) target = $region100
        $region99: #{tpu_custom_call.1} parent=95 // pred_region
          %s1712 = sand.u32 %s328, 1
          %s1713 = scalar_lea.sflag [#allocation10], %s1712
          %s1714 = sand.u32 %s328, 1
          %s1715 = smul.addr %s1714, 4
          %s1716 = scalar_lea.vmem [#allocation16], %s1715
          %1718 = dma.done %s1713, 64
        $region100: #{tpu_custom_call.1} parent=95 // pred_fallthru
          _
      $region96: #{tpu_custom_call.1} parent=5 // pred_fallthru
        _
    $region6: #{tpu_custom_call.1} parent=1 // loop_footer
      %s38 = sadd.s32 1, %s34
    $region7: #{tpu_custom_call.1} parent=1 // loop_footer_branch
      %33 = sbr.rel target = $region3
    $region8: #{tpu_custom_call.1} parent=1 // loop_exit
      _
    %1719 = vsyncpa [#allocation9], 1
    %s1720 = scalar_lea.sflag [#allocation9], 1
    %1721 = vsyncpa %s1720, 1
    %1722 = vsyncpa [#allocation12], 1
    %s1723 = scalar_lea.sflag [#allocation12], 1
    %1724 = vsyncpa %s1723, 1
    %1725 = vsyncpa [#allocation15], 1
    %s1726 = scalar_lea.sflag [#allocation15], 1
    %1727 = vsyncpa %s1726, 1
    %1728 = vsyncpa [#allocation10], 1
    %s1729 = scalar_lea.sflag [#allocation10], 1
    %1730 = vsyncpa %s1729, 1

</llo_original>
